<compile_context>
chip_gen: v7x
topology: tpu7x:2x2x1
jax: 0.10.0
libtpu: 0.0.40
codegen_flags: <defaults>
</compile_context>

<pallas_src>
import jax
import jax.numpy as jnp
from jax.experimental import pallas as pl
from jax.experimental.pallas import tpu as pltpu


def _build_call(shape, dtype, patch, wide):
    """Build a pallas_call for CreatePatches at the given static shape/dtype."""
    b, c, h, w = shape
    p = patch
    hp, wp = h // p, w // p
    n_patches = hp * wp
    patch_dim = c * p * p

    if wide:
        # Wide path: 16 strided slices + 16 reshapes + 1 concat + 1 store / batch.
        def kernel(x_ref, o_ref):
            # x_ref: (1, C, H, W) block, o_ref: (1, NP, PD) block.
            cols = []
            for ci in range(c):
                for i in range(p):
                    # rows i, i+P, ... of channel ci -> (HP, W)
                    s = x_ref[0, ci, pl.ds(i, hp, stride=p), :]
                    # row-major reshape: (HP, W) -> (NP, P); element
                    # [ph*WP + pw, j] == img[ci, ph*P + i, pw*P + j],
                    # i.e. exactly the output column block at lanes ci*P*P + i*P.
                    cols.append(s.reshape(n_patches, p))
            o_ref[0] = jnp.concatenate(cols, axis=-1)          # (NP, PD)
    else:
        # Safe fallback: the previously validated slice/concat assembly
        # (contiguous static slices + concats only; known to lower).
        def kernel(x_ref, o_ref):
            planes = [x_ref[0, ci] for ci in range(c)]          # (H, W) each
            rows = []
            for n in range(n_patches):
                ph, pw = divmod(n, wp)
                chunks = [
                    planes[ci][ph * p + i: ph * p + i + 1, pw * p:(pw + 1) * p]
                    for ci in range(c) for i in range(p)
                ]                                               # 16 x (1, P)
                rows.append(jnp.concatenate(chunks, axis=-1))   # (1, PD)
            o_ref[0] = jnp.concatenate(rows, axis=0)            # (NP, PD)

    return pl.pallas_call(
        kernel,
        out_shape=jax.ShapeDtypeStruct((b, n_patches, patch_dim), dtype),
        grid=(b,),
        # Block last-two dims equal the full array dims -> (8,128) rule satisfied.
        in_specs=[pl.BlockSpec((1, c, h, w), lambda bi: (bi, 0, 0, 0))],
        out_specs=pl.BlockSpec((1, n_patches, patch_dim), lambda bi: (bi, 0, 0)),
        compiler_params=pltpu.CompilerParams(
            dimension_semantics=("parallel",)),   # megacore sharding on v7x
    )


# Cache the chosen implementation per (shape, dtype, patch_size).
_IMPL_CACHE = {}


def create_patches(img, patch_size):
    """img: (B, C, H, W) -> (B, num_patches, patch_dim), matching the PyTorch module."""
    b, c, h, w = img.shape
    assert h % patch_size == 0 and w % patch_size == 0, \
        "Image dimension must be divisible by patch size."

    key = (img.shape, str(img.dtype), patch_size)
    impl = _IMPL_CACHE.get(key)
    if impl is not None:
        return impl(img)

    # Try the wide (strided slice + reshape) kernel; if Mosaic rejects the
    # relayout at these shapes, fall back to the proven slice/concat kernel.
    wide = _build_call(img.shape, img.dtype, patch_size, wide=True)
    try:
        out = wide(img)
        out = jax.block_until_ready(out)   # surface lowering errors here
        _IMPL_CACHE[key] = wide
        return out
    except Exception:
        safe = _build_call(img.shape, img.dtype, patch_size, wide=False)
        out = safe(img)
        _IMPL_CACHE[key] = safe
        return out


def create_patches_reference(img, p):
    """Pure-JAX reference mirroring the PyTorch unfold/permute/reshape exactly."""
    b, c, h, w = img.shape
    x = img.reshape(b, c, h // p, p, w // p, p)      # (b, c, ph, i, pw, j)
    x = x.transpose(0, 2, 4, 1, 3, 5)                # (b, ph, pw, c, i, j)
    return x.reshape(b, (h // p) * (w // p), c * p * p)


if __name__ == "__main__":
    B, C, H, W, P = 2, 4, 16, 16, 4
    NP = (H // P) * (W // P)
    PD = C * P * P

    key = jax.random.PRNGKey(0)
    img = jax.random.normal(key, (B, C, H, W), jnp.float32)

    out = create_patches(img, P)
    out = jax.block_until_ready(out)

    ref = create_patches_reference(img, P)
    assert out.shape == (B, NP, PD), f"bad shape {out.shape}"
    # Pure data movement -> must match exactly.
    assert jnp.array_equal(out, ref), f"max abs err {jnp.max(jnp.abs(out - ref))}"
    print("KERNEL_OK")
</pallas_src>

<mosaic_0001>
module attributes {stable_mosaic.version = 11 : i64} {
  func.func @kernel(%arg0: i32, %arg1: memref<1x4x16x16xf32, #tpu.memory_space<vmem>>, %arg2: memref<1x16x64xf32, #tpu.memory_space<vmem>>) attributes {dimension_semantics = [#tpu.dimension_semantics<parallel>], iteration_bounds = array<i64: 2>, scalar_prefetch = 0 : i64, scratch_operands = 0 : i64, tpu.core_type = #tpu.core_type<tc>, window_params = [{transform_indices = @transform_0, window_bounds = array<i64: 1, 4, 16, 16>}, {transform_indices = @transform_1, window_bounds = array<i64: 1, 16, 64>}]} {
    %c0 = arith.constant 0 : index
    %c0_0 = arith.constant 0 : index
    %c0_1 = arith.constant 0 : index
    %c0_2 = arith.constant 0 : index
    %0 = tpu.strided_load %arg1[%c0, %c0_0, %c0_1, %c0_2] {strides = array<i32: 1, 1, 4, 1>} : memref<1x4x16x16xf32, #tpu.memory_space<vmem>>, vector<1x1x4x16xf32>
    %1 = vector.shape_cast %0 : vector<1x1x4x16xf32> to vector<4x16xf32>
    %2 = vector.shape_cast %1 : vector<4x16xf32> to vector<16x4xf32>
    %c0_3 = arith.constant 0 : index
    %c0_4 = arith.constant 0 : index
    %c1 = arith.constant 1 : index
    %c0_5 = arith.constant 0 : index
    %3 = tpu.strided_load %arg1[%c0_3, %c0_4, %c1, %c0_5] {strides = array<i32: 1, 1, 4, 1>} : memref<1x4x16x16xf32, #tpu.memory_space<vmem>>, vector<1x1x4x16xf32>
    %4 = vector.shape_cast %3 : vector<1x1x4x16xf32> to vector<4x16xf32>
    %5 = vector.shape_cast %4 : vector<4x16xf32> to vector<16x4xf32>
    %c0_6 = arith.constant 0 : index
    %c0_7 = arith.constant 0 : index
    %c2 = arith.constant 2 : index
    %c0_8 = arith.constant 0 : index
    %6 = tpu.strided_load %arg1[%c0_6, %c0_7, %c2, %c0_8] {strides = array<i32: 1, 1, 4, 1>} : memref<1x4x16x16xf32, #tpu.memory_space<vmem>>, vector<1x1x4x16xf32>
    %7 = vector.shape_cast %6 : vector<1x1x4x16xf32> to vector<4x16xf32>
    %8 = vector.shape_cast %7 : vector<4x16xf32> to vector<16x4xf32>
    %c0_9 = arith.constant 0 : index
    %c0_10 = arith.constant 0 : index
    %c3 = arith.constant 3 : index
    %c0_11 = arith.constant 0 : index
    %9 = tpu.strided_load %arg1[%c0_9, %c0_10, %c3, %c0_11] {strides = array<i32: 1, 1, 4, 1>} : memref<1x4x16x16xf32, #tpu.memory_space<vmem>>, vector<1x1x4x16xf32>
    %10 = vector.shape_cast %9 : vector<1x1x4x16xf32> to vector<4x16xf32>
    %11 = vector.shape_cast %10 : vector<4x16xf32> to vector<16x4xf32>
    %c0_12 = arith.constant 0 : index
    %c1_13 = arith.constant 1 : index
    %c0_14 = arith.constant 0 : index
    %c0_15 = arith.constant 0 : index
    %12 = tpu.strided_load %arg1[%c0_12, %c1_13, %c0_14, %c0_15] {strides = array<i32: 1, 1, 4, 1>} : memref<1x4x16x16xf32, #tpu.memory_space<vmem>>, vector<1x1x4x16xf32>
    %13 = vector.shape_cast %12 : vector<1x1x4x16xf32> to vector<4x16xf32>
    %14 = vector.shape_cast %13 : vector<4x16xf32> to vector<16x4xf32>
    %c0_16 = arith.constant 0 : index
    %c1_17 = arith.constant 1 : index
    %c1_18 = arith.constant 1 : index
    %c0_19 = arith.constant 0 : index
    %15 = tpu.strided_load %arg1[%c0_16, %c1_17, %c1_18, %c0_19] {strides = array<i32: 1, 1, 4, 1>} : memref<1x4x16x16xf32, #tpu.memory_space<vmem>>, vector<1x1x4x16xf32>
    %16 = vector.shape_cast %15 : vector<1x1x4x16xf32> to vector<4x16xf32>
    %17 = vector.shape_cast %16 : vector<4x16xf32> to vector<16x4xf32>
    %c0_20 = arith.constant 0 : index
    %c1_21 = arith.constant 1 : index
    %c2_22 = arith.constant 2 : index
    %c0_23 = arith.constant 0 : index
    %18 = tpu.strided_load %arg1[%c0_20, %c1_21, %c2_22, %c0_23] {strides = array<i32: 1, 1, 4, 1>} : memref<1x4x16x16xf32, #tpu.memory_space<vmem>>, vector<1x1x4x16xf32>
    %19 = vector.shape_cast %18 : vector<1x1x4x16xf32> to vector<4x16xf32>
    %20 = vector.shape_cast %19 : vector<4x16xf32> to vector<16x4xf32>
    %c0_24 = arith.constant 0 : index
    %c1_25 = arith.constant 1 : index
    %c3_26 = arith.constant 3 : index
    %c0_27 = arith.constant 0 : index
    %21 = tpu.strided_load %arg1[%c0_24, %c1_25, %c3_26, %c0_27] {strides = array<i32: 1, 1, 4, 1>} : memref<1x4x16x16xf32, #tpu.memory_space<vmem>>, vector<1x1x4x16xf32>
    %22 = vector.shape_cast %21 : vector<1x1x4x16xf32> to vector<4x16xf32>
    %23 = vector.shape_cast %22 : vector<4x16xf32> to vector<16x4xf32>
    %c0_28 = arith.constant 0 : index
    %c2_29 = arith.constant 2 : index
    %c0_30 = arith.constant 0 : index
    %c0_31 = arith.constant 0 : index
    %24 = tpu.strided_load %arg1[%c0_28, %c2_29, %c0_30, %c0_31] {strides = array<i32: 1, 1, 4, 1>} : memref<1x4x16x16xf32, #tpu.memory_space<vmem>>, vector<1x1x4x16xf32>
    %25 = vector.shape_cast %24 : vector<1x1x4x16xf32> to vector<4x16xf32>
    %26 = vector.shape_cast %25 : vector<4x16xf32> to vector<16x4xf32>
    %c0_32 = arith.constant 0 : index
    %c2_33 = arith.constant 2 : index
    %c1_34 = arith.constant 1 : index
    %c0_35 = arith.constant 0 : index
    %27 = tpu.strided_load %arg1[%c0_32, %c2_33, %c1_34, %c0_35] {strides = array<i32: 1, 1, 4, 1>} : memref<1x4x16x16xf32, #tpu.memory_space<vmem>>, vector<1x1x4x16xf32>
    %28 = vector.shape_cast %27 : vector<1x1x4x16xf32> to vector<4x16xf32>
    %29 = vector.shape_cast %28 : vector<4x16xf32> to vector<16x4xf32>
    %c0_36 = arith.constant 0 : index
    %c2_37 = arith.constant 2 : index
    %c2_38 = arith.constant 2 : index
    %c0_39 = arith.constant 0 : index
    %30 = tpu.strided_load %arg1[%c0_36, %c2_37, %c2_38, %c0_39] {strides = array<i32: 1, 1, 4, 1>} : memref<1x4x16x16xf32, #tpu.memory_space<vmem>>, vector<1x1x4x16xf32>
    %31 = vector.shape_cast %30 : vector<1x1x4x16xf32> to vector<4x16xf32>
    %32 = vector.shape_cast %31 : vector<4x16xf32> to vector<16x4xf32>
    %c0_40 = arith.constant 0 : index
    %c2_41 = arith.constant 2 : index
    %c3_42 = arith.constant 3 : index
    %c0_43 = arith.constant 0 : index
    %33 = tpu.strided_load %arg1[%c0_40, %c2_41, %c3_42, %c0_43] {strides = array<i32: 1, 1, 4, 1>} : memref<1x4x16x16xf32, #tpu.memory_space<vmem>>, vector<1x1x4x16xf32>
    %34 = vector.shape_cast %33 : vector<1x1x4x16xf32> to vector<4x16xf32>
    %35 = vector.shape_cast %34 : vector<4x16xf32> to vector<16x4xf32>
    %c0_44 = arith.constant 0 : index
    %c3_45 = arith.constant 3 : index
    %c0_46 = arith.constant 0 : index
    %c0_47 = arith.constant 0 : index
    %36 = tpu.strided_load %arg1[%c0_44, %c3_45, %c0_46, %c0_47] {strides = array<i32: 1, 1, 4, 1>} : memref<1x4x16x16xf32, #tpu.memory_space<vmem>>, vector<1x1x4x16xf32>
    %37 = vector.shape_cast %36 : vector<1x1x4x16xf32> to vector<4x16xf32>
    %38 = vector.shape_cast %37 : vector<4x16xf32> to vector<16x4xf32>
    %c0_48 = arith.constant 0 : index
    %c3_49 = arith.constant 3 : index
    %c1_50 = arith.constant 1 : index
    %c0_51 = arith.constant 0 : index
    %39 = tpu.strided_load %arg1[%c0_48, %c3_49, %c1_50, %c0_51] {strides = array<i32: 1, 1, 4, 1>} : memref<1x4x16x16xf32, #tpu.memory_space<vmem>>, vector<1x1x4x16xf32>
    %40 = vector.shape_cast %39 : vector<1x1x4x16xf32> to vector<4x16xf32>
    %41 = vector.shape_cast %40 : vector<4x16xf32> to vector<16x4xf32>
    %c0_52 = arith.constant 0 : index
    %c3_53 = arith.constant 3 : index
    %c2_54 = arith.constant 2 : index
    %c0_55 = arith.constant 0 : index
    %42 = tpu.strided_load %arg1[%c0_52, %c3_53, %c2_54, %c0_55] {strides = array<i32: 1, 1, 4, 1>} : memref<1x4x16x16xf32, #tpu.memory_space<vmem>>, vector<1x1x4x16xf32>
    %43 = vector.shape_cast %42 : vector<1x1x4x16xf32> to vector<4x16xf32>
    %44 = vector.shape_cast %43 : vector<4x16xf32> to vector<16x4xf32>
    %c0_56 = arith.constant 0 : index
    %c3_57 = arith.constant 3 : index
    %c3_58 = arith.constant 3 : index
    %c0_59 = arith.constant 0 : index
    %45 = tpu.strided_load %arg1[%c0_56, %c3_57, %c3_58, %c0_59] {strides = array<i32: 1, 1, 4, 1>} : memref<1x4x16x16xf32, #tpu.memory_space<vmem>>, vector<1x1x4x16xf32>
    %46 = vector.shape_cast %45 : vector<1x1x4x16xf32> to vector<4x16xf32>
    %47 = vector.shape_cast %46 : vector<4x16xf32> to vector<16x4xf32>
    %48 = tpu.concatenate %2, %5, %8, %11, %14, %17, %20, %23, %26, %29, %32, %35, %38, %41, %44, %47 in 1 : vector<16x4xf32>, vector<16x4xf32>, vector<16x4xf32>, vector<16x4xf32>, vector<16x4xf32>, vector<16x4xf32>, vector<16x4xf32>, vector<16x4xf32>, vector<16x4xf32>, vector<16x4xf32>, vector<16x4xf32>, vector<16x4xf32>, vector<16x4xf32>, vector<16x4xf32>, vector<16x4xf32>, vector<16x4xf32> -> vector<16x64xf32>
    %c0_60 = arith.constant 0 : index
    %c0_61 = arith.constant 0 : index
    %c0_62 = arith.constant 0 : index
    %49 = vector.load %arg2[%c0_60, %c0_61, %c0_62] : memref<1x16x64xf32, #tpu.memory_space<vmem>>, vector<1x16x64xf32>
    %50 = vector.shape_cast %49 : vector<1x16x64xf32> to vector<16x64xf32>
    %51 = vector.shape_cast %48 : vector<16x64xf32> to vector<1x16x64xf32>
    tpu.vector_store %arg2[%c0_60, %c0_61, %c0_62], %51 {strides = array<i32>} : memref<1x16x64xf32, #tpu.memory_space<vmem>>, vector<1x16x64xf32>,
    return
  }
  func.func @transform_0(%arg0: i32) -> (i32, i32, i32, i32) {
    %c0_i32 = arith.constant 0 : i32
    %c0_i32_0 = arith.constant 0 : i32
    %c0_i32_1 = arith.constant 0 : i32
    %c0_i32_2 = arith.constant 0 : i32
    return %arg0, %c0_i32, %c0_i32_0, %c0_i32_1 : i32, i32, i32, i32
  }
  func.func @transform_1(%arg0: i32) -> (i32, i32, i32) {
    %c0_i32 = arith.constant 0 : i32
    %c0_i32_0 = arith.constant 0 : i32
    %c0_i32_1 = arith.constant 0 : i32
    return %arg0, %c0_i32, %c0_i32_0 : i32, i32, i32
  }
}

module attributes {stable_mosaic.version = 11 : i64} {
  func.func @kernel(%arg0: i32, %arg1: memref<1x4x16x16xf32, #tpu.memory_space<vmem>>, %arg2: memref<1x16x64xf32, #tpu.memory_space<vmem>>) attributes {dimension_semantics = [#tpu.dimension_semantics<parallel>], iteration_bounds = array<i64: 2>, scalar_prefetch = 0 : i64, scratch_operands = 0 : i64, tpu.core_type = #tpu.core_type<tc>, window_params = [{transform_indices = @transform_0, window_bounds = array<i64: 1, 4, 16, 16>}, {transform_indices = @transform_1, window_bounds = array<i64: 1, 16, 64>}]} {
    %c0 = arith.constant 0 : index
    %c0_0 = arith.constant 0 : index
    %c0_1 = arith.constant 0 : index
    %c0_2 = arith.constant 0 : index
    %0 = vector.load %arg1[%c0, %c0_0, %c0_1, %c0_2] : memref<1x4x16x16xf32, #tpu.memory_space<vmem>>, vector<1x1x16x16xf32>
    %1 = vector.shape_cast %0 : vector<1x1x16x16xf32> to vector<16x16xf32>
    %c0_3 = arith.constant 0 : index
    %c1 = arith.constant 1 : index
    %c0_4 = arith.constant 0 : index
    %c0_5 = arith.constant 0 : index
    %2 = vector.load %arg1[%c0_3, %c1, %c0_4, %c0_5] : memref<1x4x16x16xf32, #tpu.memory_space<vmem>>, vector<1x1x16x16xf32>
    %3 = vector.shape_cast %2 : vector<1x1x16x16xf32> to vector<16x16xf32>
    %c0_6 = arith.constant 0 : index
    %c2 = arith.constant 2 : index
    %c0_7 = arith.constant 0 : index
    %c0_8 = arith.constant 0 : index
    %4 = vector.load %arg1[%c0_6, %c2, %c0_7, %c0_8] : memref<1x4x16x16xf32, #tpu.memory_space<vmem>>, vector<1x1x16x16xf32>
    %5 = vector.shape_cast %4 : vector<1x1x16x16xf32> to vector<16x16xf32>
    %c0_9 = arith.constant 0 : index
    %c3 = arith.constant 3 : index
    %c0_10 = arith.constant 0 : index
    %c0_11 = arith.constant 0 : index
    %6 = vector.load %arg1[%c0_9, %c3, %c0_10, %c0_11] : memref<1x4x16x16xf32, #tpu.memory_space<vmem>>, vector<1x1x16x16xf32>
    %7 = vector.shape_cast %6 : vector<1x1x16x16xf32> to vector<16x16xf32>
    %8 = vector.extract_strided_slice %1 {offsets = [0, 0], sizes = [1, 4], strides = [1, 1]} : vector<16x16xf32> to vector<1x4xf32>
    %9 = vector.extract_strided_slice %1 {offsets = [1, 0], sizes = [1, 4], strides = [1, 1]} : vector<16x16xf32> to vector<1x4xf32>
    %10 = vector.extract_strided_slice %1 {offsets = [2, 0], sizes = [1, 4], strides = [1, 1]} : vector<16x16xf32> to vector<1x4xf32>
    %11 = vector.extract_strided_slice %1 {offsets = [3, 0], sizes = [1, 4], strides = [1, 1]} : vector<16x16xf32> to vector<1x4xf32>
    %12 = vector.extract_strided_slice %3 {offsets = [0, 0], sizes = [1, 4], strides = [1, 1]} : vector<16x16xf32> to vector<1x4xf32>
    %13 = vector.extract_strided_slice %3 {offsets = [1, 0], sizes = [1, 4], strides = [1, 1]} : vector<16x16xf32> to vector<1x4xf32>
    %14 = vector.extract_strided_slice %3 {offsets = [2, 0], sizes = [1, 4], strides = [1, 1]} : vector<16x16xf32> to vector<1x4xf32>
    %15 = vector.extract_strided_slice %3 {offsets = [3, 0], sizes = [1, 4], strides = [1, 1]} : vector<16x16xf32> to vector<1x4xf32>
    %16 = vector.extract_strided_slice %5 {offsets = [0, 0], sizes = [1, 4], strides = [1, 1]} : vector<16x16xf32> to vector<1x4xf32>
    %17 = vector.extract_strided_slice %5 {offsets = [1, 0], sizes = [1, 4], strides = [1, 1]} : vector<16x16xf32> to vector<1x4xf32>
    %18 = vector.extract_strided_slice %5 {offsets = [2, 0], sizes = [1, 4], strides = [1, 1]} : vector<16x16xf32> to vector<1x4xf32>
    %19 = vector.extract_strided_slice %5 {offsets = [3, 0], sizes = [1, 4], strides = [1, 1]} : vector<16x16xf32> to vector<1x4xf32>
    %20 = vector.extract_strided_slice %7 {offsets = [0, 0], sizes = [1, 4], strides = [1, 1]} : vector<16x16xf32> to vector<1x4xf32>
    %21 = vector.extract_strided_slice %7 {offsets = [1, 0], sizes = [1, 4], strides = [1, 1]} : vector<16x16xf32> to vector<1x4xf32>
    %22 = vector.extract_strided_slice %7 {offsets = [2, 0], sizes = [1, 4], strides = [1, 1]} : vector<16x16xf32> to vector<1x4xf32>
    %23 = vector.extract_strided_slice %7 {offsets = [3, 0], sizes = [1, 4], strides = [1, 1]} : vector<16x16xf32> to vector<1x4xf32>
    %24 = tpu.concatenate %8, %9, %10, %11, %12, %13, %14, %15, %16, %17, %18, %19, %20, %21, %22, %23 in 1 : vector<1x4xf32>, vector<1x4xf32>, vector<1x4xf32>, vector<1x4xf32>, vector<1x4xf32>, vector<1x4xf32>, vector<1x4xf32>, vector<1x4xf32>, vector<1x4xf32>, vector<1x4xf32>, vector<1x4xf32>, vector<1x4xf32>, vector<1x4xf32>, vector<1x4xf32>, vector<1x4xf32>, vector<1x4xf32> -> vector<1x64xf32>
    %25 = vector.extract_strided_slice %1 {offsets = [0, 4], sizes = [1, 4], strides = [1, 1]} : vector<16x16xf32> to vector<1x4xf32>
    %26 = vector.extract_strided_slice %1 {offsets = [1, 4], sizes = [1, 4], strides = [1, 1]} : vector<16x16xf32> to vector<1x4xf32>
    %27 = vector.extract_strided_slice %1 {offsets = [2, 4], sizes = [1, 4], strides = [1, 1]} : vector<16x16xf32> to vector<1x4xf32>
    %28 = vector.extract_strided_slice %1 {offsets = [3, 4], sizes = [1, 4], strides = [1, 1]} : vector<16x16xf32> to vector<1x4xf32>
    %29 = vector.extract_strided_slice %3 {offsets = [0, 4], sizes = [1, 4], strides = [1, 1]} : vector<16x16xf32> to vector<1x4xf32>
    %30 = vector.extract_strided_slice %3 {offsets = [1, 4], sizes = [1, 4], strides = [1, 1]} : vector<16x16xf32> to vector<1x4xf32>
    %31 = vector.extract_strided_slice %3 {offsets = [2, 4], sizes = [1, 4], strides = [1, 1]} : vector<16x16xf32> to vector<1x4xf32>
    %32 = vector.extract_strided_slice %3 {offsets = [3, 4], sizes = [1, 4], strides = [1, 1]} : vector<16x16xf32> to vector<1x4xf32>
    %33 = vector.extract_strided_slice %5 {offsets = [0, 4], sizes = [1, 4], strides = [1, 1]} : vector<16x16xf32> to vector<1x4xf32>
    %34 = vector.extract_strided_slice %5 {offsets = [1, 4], sizes = [1, 4], strides = [1, 1]} : vector<16x16xf32> to vector<1x4xf32>
    %35 = vector.extract_strided_slice %5 {offsets = [2, 4], sizes = [1, 4], strides = [1, 1]} : vector<16x16xf32> to vector<1x4xf32>
    %36 = vector.extract_strided_slice %5 {offsets = [3, 4], sizes = [1, 4], strides = [1, 1]} : vector<16x16xf32> to vector<1x4xf32>
    %37 = vector.extract_strided_slice %7 {offsets = [0, 4], sizes = [1, 4], strides = [1, 1]} : vector<16x16xf32> to vector<1x4xf32>
    %38 = vector.extract_strided_slice %7 {offsets = [1, 4], sizes = [1, 4], strides = [1, 1]} : vector<16x16xf32> to vector<1x4xf32>
    %39 = vector.extract_strided_slice %7 {offsets = [2, 4], sizes = [1, 4], strides = [1, 1]} : vector<16x16xf32> to vector<1x4xf32>
    %40 = vector.extract_strided_slice %7 {offsets = [3, 4], sizes = [1, 4], strides = [1, 1]} : vector<16x16xf32> to vector<1x4xf32>
    %41 = tpu.concatenate %25, %26, %27, %28, %29, %30, %31, %32, %33, %34, %35, %36, %37, %38, %39, %40 in 1 : vector<1x4xf32>, vector<1x4xf32>, vector<1x4xf32>, vector<1x4xf32>, vector<1x4xf32>, vector<1x4xf32>, vector<1x4xf32>, vector<1x4xf32>, vector<1x4xf32>, vector<1x4xf32>, vector<1x4xf32>, vector<1x4xf32>, vector<1x4xf32>, vector<1x4xf32>, vector<1x4xf32>, vector<1x4xf32> -> vector<1x64xf32>
    %42 = vector.extract_strided_slice %1 {offsets = [0, 8], sizes = [1, 4], strides = [1, 1]} : vector<16x16xf32> to vector<1x4xf32>
    %43 = vector.extract_strided_slice %1 {offsets = [1, 8], sizes = [1, 4], strides = [1, 1]} : vector<16x16xf32> to vector<1x4xf32>
    %44 = vector.extract_strided_slice %1 {offsets = [2, 8], sizes = [1, 4], strides = [1, 1]} : vector<16x16xf32> to vector<1x4xf32>
    %45 = vector.extract_strided_slice %1 {offsets = [3, 8], sizes = [1, 4], strides = [1, 1]} : vector<16x16xf32> to vector<1x4xf32>
    %46 = vector.extract_strided_slice %3 {offsets = [0, 8], sizes = [1, 4], strides = [1, 1]} : vector<16x16xf32> to vector<1x4xf32>
    %47 = vector.extract_strided_slice %3 {offsets = [1, 8], sizes = [1, 4], strides = [1, 1]} : vector<16x16xf32> to vector<1x4xf32>
    %48 = vector.extract_strided_slice %3 {offsets = [2, 8], sizes = [1, 4], strides = [1, 1]} : vector<16x16xf32> to vector<1x4xf32>
    %49 = vector.extract_strided_slice %3 {offsets = [3, 8], sizes = [1, 4], strides = [1, 1]} : vector<16x16xf32> to vector<1x4xf32>
    %50 = vector.extract_strided_slice %5 {offsets = [0, 8], sizes = [1, 4], strides = [1, 1]} : vector<16x16xf32> to vector<1x4xf32>
    %51 = vector.extract_strided_slice %5 {offsets = [1, 8], sizes = [1, 4], strides = [1, 1]} : vector<16x16xf32> to vector<1x4xf32>
    %52 = vector.extract_strided_slice %5 {offsets = [2, 8], sizes = [1, 4], strides = [1, 1]} : vector<16x16xf32> to vector<1x4xf32>
    %53 = vector.extract_strided_slice %5 {offsets = [3, 8], sizes = [1, 4], strides = [1, 1]} : vector<16x16xf32> to vector<1x4xf32>
    %54 = vector.extract_strided_slice %7 {offsets = [0, 8], sizes = [1, 4], strides = [1, 1]} : vector<16x16xf32> to vector<1x4xf32>
    %55 = vector.extract_strided_slice %7 {offsets = [1, 8], sizes = [1, 4], strides = [1, 1]} : vector<16x16xf32> to vector<1x4xf32>
    %56 = vector.extract_strided_slice %7 {offsets = [2, 8], sizes = [1, 4], strides = [1, 1]} : vector<16x16xf32> to vector<1x4xf32>
    %57 = vector.extract_strided_slice %7 {offsets = [3, 8], sizes = [1, 4], strides = [1, 1]} : vector<16x16xf32> to vector<1x4xf32>
    %58 = tpu.concatenate %42, %43, %44, %45, %46, %47, %48, %49, %50, %51, %52, %53, %54, %55, %56, %57 in 1 : vector<1x4xf32>, vector<1x4xf32>, vector<1x4xf32>, vector<1x4xf32>, vector<1x4xf32>, vector<1x4xf32>, vector<1x4xf32>, vector<1x4xf32>, vector<1x4xf32>, vector<1x4xf32>, vector<1x4xf32>, vector<1x4xf32>, vector<1x4xf32>, vector<1x4xf32>, vector<1x4xf32>, vector<1x4xf32> -> vector<1x64xf32>
    %59 = vector.extract_strided_slice %1 {offsets = [0, 12], sizes = [1, 4], strides = [1, 1]} : vector<16x16xf32> to vector<1x4xf32>
    %60 = vector.extract_strided_slice %1 {offsets = [1, 12], sizes = [1, 4], strides = [1, 1]} : vector<16x16xf32> to vector<1x4xf32>
    %61 = vector.extract_strided_slice %1 {offsets = [2, 12], sizes = [1, 4], strides = [1, 1]} : vector<16x16xf32> to vector<1x4xf32>
    %62 = vector.extract_strided_slice %1 {offsets = [3, 12], sizes = [1, 4], strides = [1, 1]} : vector<16x16xf32> to vector<1x4xf32>
    %63 = vector.extract_strided_slice %3 {offsets = [0, 12], sizes = [1, 4], strides = [1, 1]} : vector<16x16xf32> to vector<1x4xf32>
    %64 = vector.extract_strided_slice %3 {offsets = [1, 12], sizes = [1, 4], strides = [1, 1]} : vector<16x16xf32> to vector<1x4xf32>
    %65 = vector.extract_strided_slice %3 {offsets = [2, 12], sizes = [1, 4], strides = [1, 1]} : vector<16x16xf32> to vector<1x4xf32>
    %66 = vector.extract_strided_slice %3 {offsets = [3, 12], sizes = [1, 4], strides = [1, 1]} : vector<16x16xf32> to vector<1x4xf32>
    %67 = vector.extract_strided_slice %5 {offsets = [0, 12], sizes = [1, 4], strides = [1, 1]} : vector<16x16xf32> to vector<1x4xf32>
    %68 = vector.extract_strided_slice %5 {offsets = [1, 12], sizes = [1, 4], strides = [1, 1]} : vector<16x16xf32> to vector<1x4xf32>
    %69 = vector.extract_strided_slice %5 {offsets = [2, 12], sizes = [1, 4], strides = [1, 1]} : vector<16x16xf32> to vector<1x4xf32>
    %70 = vector.extract_strided_slice %5 {offsets = [3, 12], sizes = [1, 4], strides = [1, 1]} : vector<16x16xf32> to vector<1x4xf32>
    %71 = vector.extract_strided_slice %7 {offsets = [0, 12], sizes = [1, 4], strides = [1, 1]} : vector<16x16xf32> to vector<1x4xf32>
    %72 = vector.extract_strided_slice %7 {offsets = [1, 12], sizes = [1, 4], strides = [1, 1]} : vector<16x16xf32> to vector<1x4xf32>
    %73 = vector.extract_strided_slice %7 {offsets = [2, 12], sizes = [1, 4], strides = [1, 1]} : vector<16x16xf32> to vector<1x4xf32>
    %74 = vector.extract_strided_slice %7 {offsets = [3, 12], sizes = [1, 4], strides = [1, 1]} : vector<16x16xf32> to vector<1x4xf32>
    %75 = tpu.concatenate %59, %60, %61, %62, %63, %64, %65, %66, %67, %68, %69, %70, %71, %72, %73, %74 in 1 : vector<1x4xf32>, vector<1x4xf32>, vector<1x4xf32>, vector<1x4xf32>, vector<1x4xf32>, vector<1x4xf32>, vector<1x4xf32>, vector<1x4xf32>, vector<1x4xf32>, vector<1x4xf32>, vector<1x4xf32>, vector<1x4xf32>, vector<1x4xf32>, vector<1x4xf32>, vector<1x4xf32>, vector<1x4xf32> -> vector<1x64xf32>
    %76 = vector.extract_strided_slice %1 {offsets = [4, 0], sizes = [1, 4], strides = [1, 1]} : vector<16x16xf32> to vector<1x4xf32>
    %77 = vector.extract_strided_slice %1 {offsets = [5, 0], sizes = [1, 4], strides = [1, 1]} : vector<16x16xf32> to vector<1x4xf32>
    %78 = vector.extract_strided_slice %1 {offsets = [6, 0], sizes = [1, 4], strides = [1, 1]} : vector<16x16xf32> to vector<1x4xf32>
    %79 = vector.extract_strided_slice %1 {offsets = [7, 0], sizes = [1, 4], strides = [1, 1]} : vector<16x16xf32> to vector<1x4xf32>
    %80 = vector.extract_strided_slice %3 {offsets = [4, 0], sizes = [1, 4], strides = [1, 1]} : vector<16x16xf32> to vector<1x4xf32>
    %81 = vector.extract_strided_slice %3 {offsets = [5, 0], sizes = [1, 4], strides = [1, 1]} : vector<16x16xf32> to vector<1x4xf32>
    %82 = vector.extract_strided_slice %3 {offsets = [6, 0], sizes = [1, 4], strides = [1, 1]} : vector<16x16xf32> to vector<1x4xf32>
    %83 = vector.extract_strided_slice %3 {offsets = [7, 0], sizes = [1, 4], strides = [1, 1]} : vector<16x16xf32> to vector<1x4xf32>
    %84 = vector.extract_strided_slice %5 {offsets = [4, 0], sizes = [1, 4], strides = [1, 1]} : vector<16x16xf32> to vector<1x4xf32>
    %85 = vector.extract_strided_slice %5 {offsets = [5, 0], sizes = [1, 4], strides = [1, 1]} : vector<16x16xf32> to vector<1x4xf32>
    %86 = vector.extract_strided_slice %5 {offsets = [6, 0], sizes = [1, 4], strides = [1, 1]} : vector<16x16xf32> to vector<1x4xf32>
    %87 = vector.extract_strided_slice %5 {offsets = [7, 0], sizes = [1, 4], strides = [1, 1]} : vector<16x16xf32> to vector<1x4xf32>
    %88 = vector.extract_strided_slice %7 {offsets = [4, 0], sizes = [1, 4], strides = [1, 1]} : vector<16x16xf32> to vector<1x4xf32>
    %89 = vector.extract_strided_slice %7 {offsets = [5, 0], sizes = [1, 4], strides = [1, 1]} : vector<16x16xf32> to vector<1x4xf32>
    %90 = vector.extract_strided_slice %7 {offsets = [6, 0], sizes = [1, 4], strides = [1, 1]} : vector<16x16xf32> to vector<1x4xf32>
    %91 = vector.extract_strided_slice %7 {offsets = [7, 0], sizes = [1, 4], strides = [1, 1]} : vector<16x16xf32> to vector<1x4xf32>
    %92 = tpu.concatenate %76, %77, %78, %79, %80, %81, %82, %83, %84, %85, %86, %87, %88, %89, %90, %91 in 1 : vector<1x4xf32>, vector<1x4xf32>, vector<1x4xf32>, vector<1x4xf32>, vector<1x4xf32>, vector<1x4xf32>, vector<1x4xf32>, vector<1x4xf32>, vector<1x4xf32>, vector<1x4xf32>, vector<1x4xf32>, vector<1x4xf32>, vector<1x4xf32>, vector<1x4xf32>, vector<1x4xf32>, vector<1x4xf32> -> vector<1x64xf32>
    %93 = vector.extract_strided_slice %1 {offsets = [4, 4], sizes = [1, 4], strides = [1, 1]} : vector<16x16xf32> to vector<1x4xf32>
    %94 = vector.extract_strided_slice %1 {offsets = [5, 4], sizes = [1, 4], strides = [1, 1]} : vector<16x16xf32> to vector<1x4xf32>
    %95 = vector.extract_strided_slice %1 {offsets = [6, 4], sizes = [1, 4], strides = [1, 1]} : vector<16x16xf32> to vector<1x4xf32>
    %96 = vector.extract_strided_slice %1 {offsets = [7, 4], sizes = [1, 4], strides = [1, 1]} : vector<16x16xf32> to vector<1x4xf32>
    %97 = vector.extract_strided_slice %3 {offsets = [4, 4], sizes = [1, 4], strides = [1, 1]} : vector<16x16xf32> to vector<1x4xf32>
    %98 = vector.extract_strided_slice %3 {offsets = [5, 4], sizes = [1, 4], strides = [1, 1]} : vector<16x16xf32> to vector<1x4xf32>
    %99 = vector.extract_strided_slice %3 {offsets = [6, 4], sizes = [1, 4], strides = [1, 1]} : vector<16x16xf32> to vector<1x4xf32>
    %100 = vector.extract_strided_slice %3 {offsets = [7, 4], sizes = [1, 4], strides = [1, 1]} : vector<16x16xf32> to vector<1x4xf32>
    %101 = vector.extract_strided_slice %5 {offsets = [4, 4], sizes = [1, 4], strides = [1, 1]} : vector<16x16xf32> to vector<1x4xf32>
    %102 = vector.extract_strided_slice %5 {offsets = [5, 4], sizes = [1, 4], strides = [1, 1]} : vector<16x16xf32> to vector<1x4xf32>
    %103 = vector.extract_strided_slice %5 {offsets = [6, 4], sizes = [1, 4], strides = [1, 1]} : vector<16x16xf32> to vector<1x4xf32>
    %104 = vector.extract_strided_slice %5 {offsets = [7, 4], sizes = [1, 4], strides = [1, 1]} : vector<16x16xf32> to vector<1x4xf32>
    %105 = vector.extract_strided_slice %7 {offsets = [4, 4], sizes = [1, 4], strides = [1, 1]} : vector<16x16xf32> to vector<1x4xf32>
    %106 = vector.extract_strided_slice %7 {offsets = [5, 4], sizes = [1, 4], strides = [1, 1]} : vector<16x16xf32> to vector<1x4xf32>
    %107 = vector.extract_strided_slice %7 {offsets = [6, 4], sizes = [1, 4], strides = [1, 1]} : vector<16x16xf32> to vector<1x4xf32>
    %108 = vector.extract_strided_slice %7 {offsets = [7, 4], sizes = [1, 4], strides = [1, 1]} : vector<16x16xf32> to vector<1x4xf32>
    %109 = tpu.concatenate %93, %94, %95, %96, %97, %98, %99, %100, %101, %102, %103, %104, %105, %106, %107, %108 in 1 : vector<1x4xf32>, vector<1x4xf32>, vector<1x4xf32>, vector<1x4xf32>, vector<1x4xf32>, vector<1x4xf32>, vector<1x4xf32>, vector<1x4xf32>, vector<1x4xf32>, vector<1x4xf32>, vector<1x4xf32>, vector<1x4xf32>, vector<1x4xf32>, vector<1x4xf32>, vector<1x4xf32>, vector<1x4xf32> -> vector<1x64xf32>
    %110 = vector.extract_strided_slice %1 {offsets = [4, 8], sizes = [1, 4], strides = [1, 1]} : vector<16x16xf32> to vector<1x4xf32>
    %111 = vector.extract_strided_slice %1 {offsets = [5, 8], sizes = [1, 4], strides = [1, 1]} : vector<16x16xf32> to vector<1x4xf32>
    %112 = vector.extract_strided_slice %1 {offsets = [6, 8], sizes = [1, 4], strides = [1, 1]} : vector<16x16xf32> to vector<1x4xf32>
    %113 = vector.extract_strided_slice %1 {offsets = [7, 8], sizes = [1, 4], strides = [1, 1]} : vector<16x16xf32> to vector<1x4xf32>
    %114 = vector.extract_strided_slice %3 {offsets = [4, 8], sizes = [1, 4], strides = [1, 1]} : vector<16x16xf32> to vector<1x4xf32>
    %115 = vector.extract_strided_slice %3 {offsets = [5, 8], sizes = [1, 4], strides = [1, 1]} : vector<16x16xf32> to vector<1x4xf32>
    %116 = vector.extract_strided_slice %3 {offsets = [6, 8], sizes = [1, 4], strides = [1, 1]} : vector<16x16xf32> to vector<1x4xf32>
    %117 = vector.extract_strided_slice %3 {offsets = [7, 8], sizes = [1, 4], strides = [1, 1]} : vector<16x16xf32> to vector<1x4xf32>
    %118 = vector.extract_strided_slice %5 {offsets = [4, 8], sizes = [1, 4], strides = [1, 1]} : vector<16x16xf32> to vector<1x4xf32>
    %119 = vector.extract_strided_slice %5 {offsets = [5, 8], sizes = [1, 4], strides = [1, 1]} : vector<16x16xf32> to vector<1x4xf32>
    %120 = vector.extract_strided_slice %5 {offsets = [6, 8], sizes = [1, 4], strides = [1, 1]} : vector<16x16xf32> to vector<1x4xf32>
    %121 = vector.extract_strided_slice %5 {offsets = [7, 8], sizes = [1, 4], strides = [1, 1]} : vector<16x16xf32> to vector<1x4xf32>
    %122 = vector.extract_strided_slice %7 {offsets = [4, 8], sizes = [1, 4], strides = [1, 1]} : vector<16x16xf32> to vector<1x4xf32>
    %123 = vector.extract_strided_slice %7 {offsets = [5, 8], sizes = [1, 4], strides = [1, 1]} : vector<16x16xf32> to vector<1x4xf32>
    %124 = vector.extract_strided_slice %7 {offsets = [6, 8], sizes = [1, 4], strides = [1, 1]} : vector<16x16xf32> to vector<1x4xf32>
    %125 = vector.extract_strided_slice %7 {offsets = [7, 8], sizes = [1, 4], strides = [1, 1]} : vector<16x16xf32> to vector<1x4xf32>
    %126 = tpu.concatenate %110, %111, %112, %113, %114, %115, %116, %117, %118, %119, %120, %121, %122, %123, %124, %125 in 1 : vector<1x4xf32>, vector<1x4xf32>, vector<1x4xf32>, vector<1x4xf32>, vector<1x4xf32>, vector<1x4xf32>, vector<1x4xf32>, vector<1x4xf32>, vector<1x4xf32>, vector<1x4xf32>, vector<1x4xf32>, vector<1x4xf32>, vector<1x4xf32>, vector<1x4xf32>, vector<1x4xf32>, vector<1x4xf32> -> vector<1x64xf32>
    %127 = vector.extract_strided_slice %1 {offsets = [4, 12], sizes = [1, 4], strides = [1, 1]} : vector<16x16xf32> to vector<1x4xf32>
    %128 = vector.extract_strided_slice %1 {offsets = [5, 12], sizes = [1, 4], strides = [1, 1]} : vector<16x16xf32> to vector<1x4xf32>
    %129 = vector.extract_strided_slice %1 {offsets = [6, 12], sizes = [1, 4], strides = [1, 1]} : vector<16x16xf32> to vector<1x4xf32>
    %130 = vector.extract_strided_slice %1 {offsets = [7, 12], sizes = [1, 4], strides = [1, 1]} : vector<16x16xf32> to vector<1x4xf32>
    %131 = vector.extract_strided_slice %3 {offsets = [4, 12], sizes = [1, 4], strides = [1, 1]} : vector<16x16xf32> to vector<1x4xf32>
    %132 = vector.extract_strided_slice %3 {offsets = [5, 12], sizes = [1, 4], strides = [1, 1]} : vector<16x16xf32> to vector<1x4xf32>
    %133 = vector.extract_strided_slice %3 {offsets = [6, 12], sizes = [1, 4], strides = [1, 1]} : vector<16x16xf32> to vector<1x4xf32>
    %134 = vector.extract_strided_slice %3 {offsets = [7, 12], sizes = [1, 4], strides = [1, 1]} : vector<16x16xf32> to vector<1x4xf32>
    %135 = vector.extract_strided_slice %5 {offsets = [4, 12], sizes = [1, 4], strides = [1, 1]} : vector<16x16xf32> to vector<1x4xf32>
    %136 = vector.extract_strided_slice %5 {offsets = [5, 12], sizes = [1, 4], strides = [1, 1]} : vector<16x16xf32> to vector<1x4xf32>
    %137 = vector.extract_strided_slice %5 {offsets = [6, 12], sizes = [1, 4], strides = [1, 1]} : vector<16x16xf32> to vector<1x4xf32>
    %138 = vector.extract_strided_slice %5 {offsets = [7, 12], sizes = [1, 4], strides = [1, 1]} : vector<16x16xf32> to vector<1x4xf32>
    %139 = vector.extract_strided_slice %7 {offsets = [4, 12], sizes = [1, 4], strides = [1, 1]} : vector<16x16xf32> to vector<1x4xf32>
    %140 = vector.extract_strided_slice %7 {offsets = [5, 12], sizes = [1, 4], strides = [1, 1]} : vector<16x16xf32> to vector<1x4xf32>
    %141 = vector.extract_strided_slice %7 {offsets = [6, 12], sizes = [1, 4], strides = [1, 1]} : vector<16x16xf32> to vector<1x4xf32>
    %142 = vector.extract_strided_slice %7 {offsets = [7, 12], sizes = [1, 4], strides = [1, 1]} : vector<16x16xf32> to vector<1x4xf32>
    %143 = tpu.concatenate %127, %128, %129, %130, %131, %132, %133, %134, %135, %136, %137, %138, %139, %140, %141, %142 in 1 : vector<1x4xf32>, vector<1x4xf32>, vector<1x4xf32>, vector<1x4xf32>, vector<1x4xf32>, vector<1x4xf32>, vector<1x4xf32>, vector<1x4xf32>, vector<1x4xf32>, vector<1x4xf32>, vector<1x4xf32>, vector<1x4xf32>, vector<1x4xf32>, vector<1x4xf32>, vector<1x4xf32>, vector<1x4xf32> -> vector<1x64xf32>
    %144 = vector.extract_strided_slice %1 {offsets = [8, 0], sizes = [1, 4], strides = [1, 1]} : vector<16x16xf32> to vector<1x4xf32>
    %145 = vector.extract_strided_slice %1 {offsets = [9, 0], sizes = [1, 4], strides = [1, 1]} : vector<16x16xf32> to vector<1x4xf32>
    %146 = vector.extract_strided_slice %1 {offsets = [10, 0], sizes = [1, 4], strides = [1, 1]} : vector<16x16xf32> to vector<1x4xf32>
    %147 = vector.extract_strided_slice %1 {offsets = [11, 0], sizes = [1, 4], strides = [1, 1]} : vector<16x16xf32> to vector<1x4xf32>
    %148 = vector.extract_strided_slice %3 {offsets = [8, 0], sizes = [1, 4], strides = [1, 1]} : vector<16x16xf32> to vector<1x4xf32>
    %149 = vector.extract_strided_slice %3 {offsets = [9, 0], sizes = [1, 4], strides = [1, 1]} : vector<16x16xf32> to vector<1x4xf32>
    %150 = vector.extract_strided_slice %3 {offsets = [10, 0], sizes = [1, 4], strides = [1, 1]} : vector<16x16xf32> to vector<1x4xf32>
    %151 = vector.extract_strided_slice %3 {offsets = [11, 0], sizes = [1, 4], strides = [1, 1]} : vector<16x16xf32> to vector<1x4xf32>
    %152 = vector.extract_strided_slice %5 {offsets = [8, 0], sizes = [1, 4], strides = [1, 1]} : vector<16x16xf32> to vector<1x4xf32>
    %153 = vector.extract_strided_slice %5 {offsets = [9, 0], sizes = [1, 4], strides = [1, 1]} : vector<16x16xf32> to vector<1x4xf32>
    %154 = vector.extract_strided_slice %5 {offsets = [10, 0], sizes = [1, 4], strides = [1, 1]} : vector<16x16xf32> to vector<1x4xf32>
    %155 = vector.extract_strided_slice %5 {offsets = [11, 0], sizes = [1, 4], strides = [1, 1]} : vector<16x16xf32> to vector<1x4xf32>
    %156 = vector.extract_strided_slice %7 {offsets = [8, 0], sizes = [1, 4], strides = [1, 1]} : vector<16x16xf32> to vector<1x4xf32>
    %157 = vector.extract_strided_slice %7 {offsets = [9, 0], sizes = [1, 4], strides = [1, 1]} : vector<16x16xf32> to vector<1x4xf32>
    %158 = vector.extract_strided_slice %7 {offsets = [10, 0], sizes = [1, 4], strides = [1, 1]} : vector<16x16xf32> to vector<1x4xf32>
    %159 = vector.extract_strided_slice %7 {offsets = [11, 0], sizes = [1, 4], strides = [1, 1]} : vector<16x16xf32> to vector<1x4xf32>
    %160 = tpu.concatenate %144, %145, %146, %147, %148, %149, %150, %151, %152, %153, %154, %155, %156, %157, %158, %159 in 1 : vector<1x4xf32>, vector<1x4xf32>, vector<1x4xf32>, vector<1x4xf32>, vector<1x4xf32>, vector<1x4xf32>, vector<1x4xf32>, vector<1x4xf32>, vector<1x4xf32>, vector<1x4xf32>, vector<1x4xf32>, vector<1x4xf32>, vector<1x4xf32>, vector<1x4xf32>, vector<1x4xf32>, vector<1x4xf32> -> vector<1x64xf32>
    %161 = vector.extract_strided_slice %1 {offsets = [8, 4], sizes = [1, 4], strides = [1, 1]} : vector<16x16xf32> to vector<1x4xf32>
    %162 = vector.extract_strided_slice %1 {offsets = [9, 4], sizes = [1, 4], strides = [1, 1]} : vector<16x16xf32> to vector<1x4xf32>
    %163 = vector.extract_strided_slice %1 {offsets = [10, 4], sizes = [1, 4], strides = [1, 1]} : vector<16x16xf32> to vector<1x4xf32>
    %164 = vector.extract_strided_slice %1 {offsets = [11, 4], sizes = [1, 4], strides = [1, 1]} : vector<16x16xf32> to vector<1x4xf32>
    %165 = vector.extract_strided_slice %3 {offsets = [8, 4], sizes = [1, 4], strides = [1, 1]} : vector<16x16xf32> to vector<1x4xf32>
    %166 = vector.extract_strided_slice %3 {offsets = [9, 4], sizes = [1, 4], strides = [1, 1]} : vector<16x16xf32> to vector<1x4xf32>
    %167 = vector.extract_strided_slice %3 {offsets = [10, 4], sizes = [1, 4], strides = [1, 1]} : vector<16x16xf32> to vector<1x4xf32>
    %168 = vector.extract_strided_slice %3 {offsets = [11, 4], sizes = [1, 4], strides = [1, 1]} : vector<16x16xf32> to vector<1x4xf32>
    %169 = vector.extract_strided_slice %5 {offsets = [8, 4], sizes = [1, 4], strides = [1, 1]} : vector<16x16xf32> to vector<1x4xf32>
    %170 = vector.extract_strided_slice %5 {offsets = [9, 4], sizes = [1, 4], strides = [1, 1]} : vector<16x16xf32> to vector<1x4xf32>
    %171 = vector.extract_strided_slice %5 {offsets = [10, 4], sizes = [1, 4], strides = [1, 1]} : vector<16x16xf32> to vector<1x4xf32>
    %172 = vector.extract_strided_slice %5 {offsets = [11, 4], sizes = [1, 4], strides = [1, 1]} : vector<16x16xf32> to vector<1x4xf32>
    %173 = vector.extract_strided_slice %7 {offsets = [8, 4], sizes = [1, 4], strides = [1, 1]} : vector<16x16xf32> to vector<1x4xf32>
    %174 = vector.extract_strided_slice %7 {offsets = [9, 4], sizes = [1, 4], strides = [1, 1]} : vector<16x16xf32> to vector<1x4xf32>
    %175 = vector.extract_strided_slice %7 {offsets = [10, 4], sizes = [1, 4], strides = [1, 1]} : vector<16x16xf32> to vector<1x4xf32>
    %176 = vector.extract_strided_slice %7 {offsets = [11, 4], sizes = [1, 4], strides = [1, 1]} : vector<16x16xf32> to vector<1x4xf32>
    %177 = tpu.concatenate %161, %162, %163, %164, %165, %166, %167, %168, %169, %170, %171, %172, %173, %174, %175, %176 in 1 : vector<1x4xf32>, vector<1x4xf32>, vector<1x4xf32>, vector<1x4xf32>, vector<1x4xf32>, vector<1x4xf32>, vector<1x4xf32>, vector<1x4xf32>, vector<1x4xf32>, vector<1x4xf32>, vector<1x4xf32>, vector<1x4xf32>, vector<1x4xf32>, vector<1x4xf32>, vector<1x4xf32>, vector<1x4xf32> -> vector<1x64xf32>
    %178 = vector.extract_strided_slice %1 {offsets = [8, 8], sizes = [1, 4], strides = [1, 1]} : vector<16x16xf32> to vector<1x4xf32>
    %179 = vector.extract_strided_slice %1 {offsets = [9, 8], sizes = [1, 4], strides = [1, 1]} : vector<16x16xf32> to vector<1x4xf32>
    %180 = vector.extract_strided_slice %1 {offsets = [10, 8], sizes = [1, 4], strides = [1, 1]} : vector<16x16xf32> to vector<1x4xf32>
    %181 = vector.extract_strided_slice %1 {offsets = [11, 8], sizes = [1, 4], strides = [1, 1]} : vector<16x16xf32> to vector<1x4xf32>
    %182 = vector.extract_strided_slice %3 {offsets = [8, 8], sizes = [1, 4], strides = [1, 1]} : vector<16x16xf32> to vector<1x4xf32>
    %183 = vector.extract_strided_slice %3 {offsets = [9, 8], sizes = [1, 4], strides = [1, 1]} : vector<16x16xf32> to vector<1x4xf32>
    %184 = vector.extract_strided_slice %3 {offsets = [10, 8], sizes = [1, 4], strides = [1, 1]} : vector<16x16xf32> to vector<1x4xf32>
    %185 = vector.extract_strided_slice %3 {offsets = [11, 8], sizes = [1, 4], strides = [1, 1]} : vector<16x16xf32> to vector<1x4xf32>
    %186 = vector.extract_strided_slice %5 {offsets = [8, 8], sizes = [1, 4], strides = [1, 1]} : vector<16x16xf32> to vector<1x4xf32>
    %187 = vector.extract_strided_slice %5 {offsets = [9, 8], sizes = [1, 4], strides = [1, 1]} : vector<16x16xf32> to vector<1x4xf32>
    %188 = vector.extract_strided_slice %5 {offsets = [10, 8], sizes = [1, 4], strides = [1, 1]} : vector<16x16xf32> to vector<1x4xf32>
    %189 = vector.extract_strided_slice %5 {offsets = [11, 8], sizes = [1, 4], strides = [1, 1]} : vector<16x16xf32> to vector<1x4xf32>
    %190 = vector.extract_strided_slice %7 {offsets = [8, 8], sizes = [1, 4], strides = [1, 1]} : vector<16x16xf32> to vector<1x4xf32>
    %191 = vector.extract_strided_slice %7 {offsets = [9, 8], sizes = [1, 4], strides = [1, 1]} : vector<16x16xf32> to vector<1x4xf32>
    %192 = vector.extract_strided_slice %7 {offsets = [10, 8], sizes = [1, 4], strides = [1, 1]} : vector<16x16xf32> to vector<1x4xf32>
    %193 = vector.extract_strided_slice %7 {offsets = [11, 8], sizes = [1, 4], strides = [1, 1]} : vector<16x16xf32> to vector<1x4xf32>
    %194 = tpu.concatenate %178, %179, %180, %181, %182, %183, %184, %185, %186, %187, %188, %189, %190, %191, %192, %193 in 1 : vector<1x4xf32>, vector<1x4xf32>, vector<1x4xf32>, vector<1x4xf32>, vector<1x4xf32>, vector<1x4xf32>, vector<1x4xf32>, vector<1x4xf32>, vector<1x4xf32>, vector<1x4xf32>, vector<1x4xf32>, vector<1x4xf32>, vector<1x4xf32>, vector<1x4xf32>, vector<1x4xf32>, vector<1x4xf32> -> vector<1x64xf32>
    %195 = vector.extract_strided_slice %1 {offsets = [8, 12], sizes = [1, 4], strides = [1, 1]} : vector<16x16xf32> to vector<1x4xf32>
    %196 = vector.extract_strided_slice %1 {offsets = [9, 12], sizes = [1, 4], strides = [1, 1]} : vector<16x16xf32> to vector<1x4xf32>
    %197 = vector.extract_strided_slice %1 {offsets = [10, 12], sizes = [1, 4], strides = [1, 1]} : vector<16x16xf32> to vector<1x4xf32>
    %198 = vector.extract_strided_slice %1 {offsets = [11, 12], sizes = [1, 4], strides = [1, 1]} : vector<16x16xf32> to vector<1x4xf32>
    %199 = vector.extract_strided_slice %3 {offsets = [8, 12], sizes = [1, 4], strides = [1, 1]} : vector<16x16xf32> to vector<1x4xf32>
    %200 = vector.extract_strided_slice %3 {offsets = [9, 12], sizes = [1, 4], strides = [1, 1]} : vector<16x16xf32> to vector<1x4xf32>
    %201 = vector.extract_strided_slice %3 {offsets = [10, 12], sizes = [1, 4], strides = [1, 1]} : vector<16x16xf32> to vector<1x4xf32>
    %202 = vector.extract_strided_slice %3 {offsets = [11, 12], sizes = [1, 4], strides = [1, 1]} : vector<16x16xf32> to vector<1x4xf32>
    %203 = vector.extract_strided_slice %5 {offsets = [8, 12], sizes = [1, 4], strides = [1, 1]} : vector<16x16xf32> to vector<1x4xf32>
    %204 = vector.extract_strided_slice %5 {offsets = [9, 12], sizes = [1, 4], strides = [1, 1]} : vector<16x16xf32> to vector<1x4xf32>
    %205 = vector.extract_strided_slice %5 {offsets = [10, 12], sizes = [1, 4], strides = [1, 1]} : vector<16x16xf32> to vector<1x4xf32>
    %206 = vector.extract_strided_slice %5 {offsets = [11, 12], sizes = [1, 4], strides = [1, 1]} : vector<16x16xf32> to vector<1x4xf32>
    %207 = vector.extract_strided_slice %7 {offsets = [8, 12], sizes = [1, 4], strides = [1, 1]} : vector<16x16xf32> to vector<1x4xf32>
    %208 = vector.extract_strided_slice %7 {offsets = [9, 12], sizes = [1, 4], strides = [1, 1]} : vector<16x16xf32> to vector<1x4xf32>
    %209 = vector.extract_strided_slice %7 {offsets = [10, 12], sizes = [1, 4], strides = [1, 1]} : vector<16x16xf32> to vector<1x4xf32>
    %210 = vector.extract_strided_slice %7 {offsets = [11, 12], sizes = [1, 4], strides = [1, 1]} : vector<16x16xf32> to vector<1x4xf32>
    %211 = tpu.concatenate %195, %196, %197, %198, %199, %200, %201, %202, %203, %204, %205, %206, %207, %208, %209, %210 in 1 : vector<1x4xf32>, vector<1x4xf32>, vector<1x4xf32>, vector<1x4xf32>, vector<1x4xf32>, vector<1x4xf32>, vector<1x4xf32>, vector<1x4xf32>, vector<1x4xf32>, vector<1x4xf32>, vector<1x4xf32>, vector<1x4xf32>, vector<1x4xf32>, vector<1x4xf32>, vector<1x4xf32>, vector<1x4xf32> -> vector<1x64xf32>
    %212 = vector.extract_strided_slice %1 {offsets = [12, 0], sizes = [1, 4], strides = [1, 1]} : vector<16x16xf32> to vector<1x4xf32>
    %213 = vector.extract_strided_slice %1 {offsets = [13, 0], sizes = [1, 4], strides = [1, 1]} : vector<16x16xf32> to vector<1x4xf32>
    %214 = vector.extract_strided_slice %1 {offsets = [14, 0], sizes = [1, 4], strides = [1, 1]} : vector<16x16xf32> to vector<1x4xf32>
    %215 = vector.extract_strided_slice %1 {offsets = [15, 0], sizes = [1, 4], strides = [1, 1]} : vector<16x16xf32> to vector<1x4xf32>
    %216 = vector.extract_strided_slice %3 {offsets = [12, 0], sizes = [1, 4], strides = [1, 1]} : vector<16x16xf32> to vector<1x4xf32>
    %217 = vector.extract_strided_slice %3 {offsets = [13, 0], sizes = [1, 4], strides = [1, 1]} : vector<16x16xf32> to vector<1x4xf32>
    %218 = vector.extract_strided_slice %3 {offsets = [14, 0], sizes = [1, 4], strides = [1, 1]} : vector<16x16xf32> to vector<1x4xf32>
    %219 = vector.extract_strided_slice %3 {offsets = [15, 0], sizes = [1, 4], strides = [1, 1]} : vector<16x16xf32> to vector<1x4xf32>
    %220 = vector.extract_strided_slice %5 {offsets = [12, 0], sizes = [1, 4], strides = [1, 1]} : vector<16x16xf32> to vector<1x4xf32>
    %221 = vector.extract_strided_slice %5 {offsets = [13, 0], sizes = [1, 4], strides = [1, 1]} : vector<16x16xf32> to vector<1x4xf32>
    %222 = vector.extract_strided_slice %5 {offsets = [14, 0], sizes = [1, 4], strides = [1, 1]} : vector<16x16xf32> to vector<1x4xf32>
    %223 = vector.extract_strided_slice %5 {offsets = [15, 0], sizes = [1, 4], strides = [1, 1]} : vector<16x16xf32> to vector<1x4xf32>
    %224 = vector.extract_strided_slice %7 {offsets = [12, 0], sizes = [1, 4], strides = [1, 1]} : vector<16x16xf32> to vector<1x4xf32>
    %225 = vector.extract_strided_slice %7 {offsets = [13, 0], sizes = [1, 4], strides = [1, 1]} : vector<16x16xf32> to vector<1x4xf32>
    %226 = vector.extract_strided_slice %7 {offsets = [14, 0], sizes = [1, 4], strides = [1, 1]} : vector<16x16xf32> to vector<1x4xf32>
    %227 = vector.extract_strided_slice %7 {offsets = [15, 0], sizes = [1, 4], strides = [1, 1]} : vector<16x16xf32> to vector<1x4xf32>
    %228 = tpu.concatenate %212, %213, %214, %215, %216, %217, %218, %219, %220, %221, %222, %223, %224, %225, %226, %227 in 1 : vector<1x4xf32>, vector<1x4xf32>, vector<1x4xf32>, vector<1x4xf32>, vector<1x4xf32>, vector<1x4xf32>, vector<1x4xf32>, vector<1x4xf32>, vector<1x4xf32>, vector<1x4xf32>, vector<1x4xf32>, vector<1x4xf32>, vector<1x4xf32>, vector<1x4xf32>, vector<1x4xf32>, vector<1x4xf32> -> vector<1x64xf32>
    %229 = vector.extract_strided_slice %1 {offsets = [12, 4], sizes = [1, 4], strides = [1, 1]} : vector<16x16xf32> to vector<1x4xf32>
    %230 = vector.extract_strided_slice %1 {offsets = [13, 4], sizes = [1, 4], strides = [1, 1]} : vector<16x16xf32> to vector<1x4xf32>
    %231 = vector.extract_strided_slice %1 {offsets = [14, 4], sizes = [1, 4], strides = [1, 1]} : vector<16x16xf32> to vector<1x4xf32>
    %232 = vector.extract_strided_slice %1 {offsets = [15, 4], sizes = [1, 4], strides = [1, 1]} : vector<16x16xf32> to vector<1x4xf32>
    %233 = vector.extract_strided_slice %3 {offsets = [12, 4], sizes = [1, 4], strides = [1, 1]} : vector<16x16xf32> to vector<1x4xf32>
    %234 = vector.extract_strided_slice %3 {offsets = [13, 4], sizes = [1, 4], strides = [1, 1]} : vector<16x16xf32> to vector<1x4xf32>
    %235 = vector.extract_strided_slice %3 {offsets = [14, 4], sizes = [1, 4], strides = [1, 1]} : vector<16x16xf32> to vector<1x4xf32>
    %236 = vector.extract_strided_slice %3 {offsets = [15, 4], sizes = [1, 4], strides = [1, 1]} : vector<16x16xf32> to vector<1x4xf32>
    %237 = vector.extract_strided_slice %5 {offsets = [12, 4], sizes = [1, 4], strides = [1, 1]} : vector<16x16xf32> to vector<1x4xf32>
    %238 = vector.extract_strided_slice %5 {offsets = [13, 4], sizes = [1, 4], strides = [1, 1]} : vector<16x16xf32> to vector<1x4xf32>
    %239 = vector.extract_strided_slice %5 {offsets = [14, 4], sizes = [1, 4], strides = [1, 1]} : vector<16x16xf32> to vector<1x4xf32>
    %240 = vector.extract_strided_slice %5 {offsets = [15, 4], sizes = [1, 4], strides = [1, 1]} : vector<16x16xf32> to vector<1x4xf32>
    %241 = vector.extract_strided_slice %7 {offsets = [12, 4], sizes = [1, 4], strides = [1, 1]} : vector<16x16xf32> to vector<1x4xf32>
    %242 = vector.extract_strided_slice %7 {offsets = [13, 4], sizes = [1, 4], strides = [1, 1]} : vector<16x16xf32> to vector<1x4xf32>
    %243 = vector.extract_strided_slice %7 {offsets = [14, 4], sizes = [1, 4], strides = [1, 1]} : vector<16x16xf32> to vector<1x4xf32>
    %244 = vector.extract_strided_slice %7 {offsets = [15, 4], sizes = [1, 4], strides = [1, 1]} : vector<16x16xf32> to vector<1x4xf32>
    %245 = tpu.concatenate %229, %230, %231, %232, %233, %234, %235, %236, %237, %238, %239, %240, %241, %242, %243, %244 in 1 : vector<1x4xf32>, vector<1x4xf32>, vector<1x4xf32>, vector<1x4xf32>, vector<1x4xf32>, vector<1x4xf32>, vector<1x4xf32>, vector<1x4xf32>, vector<1x4xf32>, vector<1x4xf32>, vector<1x4xf32>, vector<1x4xf32>, vector<1x4xf32>, vector<1x4xf32>, vector<1x4xf32>, vector<1x4xf32> -> vector<1x64xf32>
    %246 = vector.extract_strided_slice %1 {offsets = [12, 8], sizes = [1, 4], strides = [1, 1]} : vector<16x16xf32> to vector<1x4xf32>
    %247 = vector.extract_strided_slice %1 {offsets = [13, 8], sizes = [1, 4], strides = [1, 1]} : vector<16x16xf32> to vector<1x4xf32>
    %248 = vector.extract_strided_slice %1 {offsets = [14, 8], sizes = [1, 4], strides = [1, 1]} : vector<16x16xf32> to vector<1x4xf32>
    %249 = vector.extract_strided_slice %1 {offsets = [15, 8], sizes = [1, 4], strides = [1, 1]} : vector<16x16xf32> to vector<1x4xf32>
    %250 = vector.extract_strided_slice %3 {offsets = [12, 8], sizes = [1, 4], strides = [1, 1]} : vector<16x16xf32> to vector<1x4xf32>
    %251 = vector.extract_strided_slice %3 {offsets = [13, 8], sizes = [1, 4], strides = [1, 1]} : vector<16x16xf32> to vector<1x4xf32>
    %252 = vector.extract_strided_slice %3 {offsets = [14, 8], sizes = [1, 4], strides = [1, 1]} : vector<16x16xf32> to vector<1x4xf32>
    %253 = vector.extract_strided_slice %3 {offsets = [15, 8], sizes = [1, 4], strides = [1, 1]} : vector<16x16xf32> to vector<1x4xf32>
    %254 = vector.extract_strided_slice %5 {offsets = [12, 8], sizes = [1, 4], strides = [1, 1]} : vector<16x16xf32> to vector<1x4xf32>
    %255 = vector.extract_strided_slice %5 {offsets = [13, 8], sizes = [1, 4], strides = [1, 1]} : vector<16x16xf32> to vector<1x4xf32>
    %256 = vector.extract_strided_slice %5 {offsets = [14, 8], sizes = [1, 4], strides = [1, 1]} : vector<16x16xf32> to vector<1x4xf32>
    %257 = vector.extract_strided_slice %5 {offsets = [15, 8], sizes = [1, 4], strides = [1, 1]} : vector<16x16xf32> to vector<1x4xf32>
    %258 = vector.extract_strided_slice %7 {offsets = [12, 8], sizes = [1, 4], strides = [1, 1]} : vector<16x16xf32> to vector<1x4xf32>
    %259 = vector.extract_strided_slice %7 {offsets = [13, 8], sizes = [1, 4], strides = [1, 1]} : vector<16x16xf32> to vector<1x4xf32>
    %260 = vector.extract_strided_slice %7 {offsets = [14, 8], sizes = [1, 4], strides = [1, 1]} : vector<16x16xf32> to vector<1x4xf32>
    %261 = vector.extract_strided_slice %7 {offsets = [15, 8], sizes = [1, 4], strides = [1, 1]} : vector<16x16xf32> to vector<1x4xf32>
    %262 = tpu.concatenate %246, %247, %248, %249, %250, %251, %252, %253, %254, %255, %256, %257, %258, %259, %260, %261 in 1 : vector<1x4xf32>, vector<1x4xf32>, vector<1x4xf32>, vector<1x4xf32>, vector<1x4xf32>, vector<1x4xf32>, vector<1x4xf32>, vector<1x4xf32>, vector<1x4xf32>, vector<1x4xf32>, vector<1x4xf32>, vector<1x4xf32>, vector<1x4xf32>, vector<1x4xf32>, vector<1x4xf32>, vector<1x4xf32> -> vector<1x64xf32>
    %263 = vector.extract_strided_slice %1 {offsets = [12, 12], sizes = [1, 4], strides = [1, 1]} : vector<16x16xf32> to vector<1x4xf32>
    %264 = vector.extract_strided_slice %1 {offsets = [13, 12], sizes = [1, 4], strides = [1, 1]} : vector<16x16xf32> to vector<1x4xf32>
    %265 = vector.extract_strided_slice %1 {offsets = [14, 12], sizes = [1, 4], strides = [1, 1]} : vector<16x16xf32> to vector<1x4xf32>
    %266 = vector.extract_strided_slice %1 {offsets = [15, 12], sizes = [1, 4], strides = [1, 1]} : vector<16x16xf32> to vector<1x4xf32>
    %267 = vector.extract_strided_slice %3 {offsets = [12, 12], sizes = [1, 4], strides = [1, 1]} : vector<16x16xf32> to vector<1x4xf32>
    %268 = vector.extract_strided_slice %3 {offsets = [13, 12], sizes = [1, 4], strides = [1, 1]} : vector<16x16xf32> to vector<1x4xf32>
    %269 = vector.extract_strided_slice %3 {offsets = [14, 12], sizes = [1, 4], strides = [1, 1]} : vector<16x16xf32> to vector<1x4xf32>
    %270 = vector.extract_strided_slice %3 {offsets = [15, 12], sizes = [1, 4], strides = [1, 1]} : vector<16x16xf32> to vector<1x4xf32>
    %271 = vector.extract_strided_slice %5 {offsets = [12, 12], sizes = [1, 4], strides = [1, 1]} : vector<16x16xf32> to vector<1x4xf32>
    %272 = vector.extract_strided_slice %5 {offsets = [13, 12], sizes = [1, 4], strides = [1, 1]} : vector<16x16xf32> to vector<1x4xf32>
    %273 = vector.extract_strided_slice %5 {offsets = [14, 12], sizes = [1, 4], strides = [1, 1]} : vector<16x16xf32> to vector<1x4xf32>
    %274 = vector.extract_strided_slice %5 {offsets = [15, 12], sizes = [1, 4], strides = [1, 1]} : vector<16x16xf32> to vector<1x4xf32>
    %275 = vector.extract_strided_slice %7 {offsets = [12, 12], sizes = [1, 4], strides = [1, 1]} : vector<16x16xf32> to vector<1x4xf32>
    %276 = vector.extract_strided_slice %7 {offsets = [13, 12], sizes = [1, 4], strides = [1, 1]} : vector<16x16xf32> to vector<1x4xf32>
    %277 = vector.extract_strided_slice %7 {offsets = [14, 12], sizes = [1, 4], strides = [1, 1]} : vector<16x16xf32> to vector<1x4xf32>
    %278 = vector.extract_strided_slice %7 {offsets = [15, 12], sizes = [1, 4], strides = [1, 1]} : vector<16x16xf32> to vector<1x4xf32>
    %279 = tpu.concatenate %263, %264, %265, %266, %267, %268, %269, %270, %271, %272, %273, %274, %275, %276, %277, %278 in 1 : vector<1x4xf32>, vector<1x4xf32>, vector<1x4xf32>, vector<1x4xf32>, vector<1x4xf32>, vector<1x4xf32>, vector<1x4xf32>, vector<1x4xf32>, vector<1x4xf32>, vector<1x4xf32>, vector<1x4xf32>, vector<1x4xf32>, vector<1x4xf32>, vector<1x4xf32>, vector<1x4xf32>, vector<1x4xf32> -> vector<1x64xf32>
    %280 = tpu.concatenate %24, %41, %58, %75, %92, %109, %126, %143, %160, %177, %194, %211, %228, %245, %262, %279 in 0 : vector<1x64xf32>, vector<1x64xf32>, vector<1x64xf32>, vector<1x64xf32>, vector<1x64xf32>, vector<1x64xf32>, vector<1x64xf32>, vector<1x64xf32>, vector<1x64xf32>, vector<1x64xf32>, vector<1x64xf32>, vector<1x64xf32>, vector<1x64xf32>, vector<1x64xf32>, vector<1x64xf32>, vector<1x64xf32> -> vector<16x64xf32>
    %c0_12 = arith.constant 0 : index
    %c0_13 = arith.constant 0 : index
    %c0_14 = arith.constant 0 : index
    %281 = vector.load %arg2[%c0_12, %c0_13, %c0_14] : memref<1x16x64xf32, #tpu.memory_space<vmem>>, vector<1x16x64xf32>
    %282 = vector.shape_cast %281 : vector<1x16x64xf32> to vector<16x64xf32>
    %283 = vector.shape_cast %280 : vector<16x64xf32> to vector<1x16x64xf32>
    tpu.vector_store %arg2[%c0_12, %c0_13, %c0_14], %283 {strides = array<i32>} : memref<1x16x64xf32, #tpu.memory_space<vmem>>, vector<1x16x64xf32>,
    return
  }
  func.func @transform_0(%arg0: i32) -> (i32, i32, i32, i32) {
    %c0_i32 = arith.constant 0 : i32
    %c0_i32_0 = arith.constant 0 : i32
    %c0_i32_1 = arith.constant 0 : i32
    %c0_i32_2 = arith.constant 0 : i32
    return %arg0, %c0_i32, %c0_i32_0, %c0_i32_1 : i32, i32, i32, i32
  }
  func.func @transform_1(%arg0: i32) -> (i32, i32, i32) {
    %c0_i32 = arith.constant 0 : i32
    %c0_i32_0 = arith.constant 0 : i32
    %c0_i32_1 = arith.constant 0 : i32
    return %arg0, %c0_i32, %c0_i32_0 : i32, i32, i32
  }
}

</mosaic_0001>

<llo_original>
// kernel: tpu_custom_call.1
$region0: #{tpu_custom_call.1}
  #allocation0 [shape = 'u32[]', space=smem, size = 0x4, offset = 0x4, fixed_abs, tag = 'smem constant byte address 0x4 - core index']
  #allocation1 [shape = 'u32[144,128]{1,0:T(1,128)}', space=vmem, size = 0x12000, scoped, tag = 'internal scratch']
  %s0 = inlined_call_operand.hbm [shape: f32[2,4,16,16], index: 0, kind: input, shape index: {}]
  %s1 = inlined_call_operand.hbm [shape: f32[2,16,64], index: 1, kind: output, shape index: {}]
  %s2 = sld [smem:[#allocation0]]
  $region41: #{tpu_custom_call.1} parent=0
    _
  %s4 = ssub.s32 1, %s2
  %s5 = scalar_select 0, %s4, %s2
  $region1: #{tpu_custom_call.1} parent=0
    #allocation2 [shape = 'u8[65536]{0}', space=vmem, size = 0x10000, scoped, tag = 'input window, operand 0']
    #allocation3 [shape = 's32[2]{0}', space=sflag, size = 0x8, scoped, tag = 'scoped memory for tpu_custom_call.1']
    #allocation4 [shape = 's32[2]{0}', space=sflag, size = 0x8, scoped, tag = 'scoped memory for tpu_custom_call.1']
    #allocation5 [shape = 'u8[16384]{0}', space=vmem, size = 0x4000, scoped, tag = 'output window, operand 0']
    %6 = vsyncpa [#allocation3], 0
    %s7 = scalar_lea.sflag [#allocation3], 1
    %8 = vsyncpa %s7, 0
    %9 = vsyncpa [#allocation4], 0
    %s10 = scalar_lea.sflag [#allocation4], 1
    %11 = vsyncpa %s10, 0
    loop: start=0, step=1, limit=4
    $region2: #{tpu_custom_call.1} parent=1 // loop_pre_header
      _
    $region3: #{tpu_custom_call.1} parent=1 // loop_header
      %s13 = sphi 0, %s17
      %p14 = scmp.ge.s32.totalorder %s13, 4
      %s23 = sphi 0, %s25
      %s26 = sphi 0, %s23
      %s27 = sphi 0, %s26
      %s43 = sphi 0, %s27
      %s49 = sphi 0, %s51
      %s52 = sphi 0, %s49
      %s53 = sphi 0, %s52
      %s69 = sphi 0, %s53
    $region4: #{tpu_custom_call.1} parent=1 // loop_header_branch
      %16 = sbr.rel (%p14) target = $region8
    $region5: #{tpu_custom_call.1} parent=1 // loop_body
      %s18 = ssub.s32 %s13, 1
      %s19 = ssub.s32 %s13, 2
      %s20 = sadd.s32 %s13, 1
      %s21 = ssub.s32 %s13, %s20
      %p22 = scmp.eq.s32.totalorder %s21, 0
      %s24 = sadd.s32 %s23, 1
      %s25 = scalar_select %p22, %s23, %s24
      %p28 = pneg %p22
      %p29 = scmp.eq.s32.totalorder %s13, 1
      %p30 = por %p28, %p29
      %p31 = scmp.ne.s32.totalorder %s23, %s26
      %p32 = scmp.eq.s32.totalorder %s13, 0
      %p33 = por %p31, %p32
      %p34 = scmp.ne.s32.totalorder %s23, %s26
      %p35 = scmp.eq.s32.totalorder %s18, 1
      %p36 = por %p34, %p35
      %p37 = scmp.ne.s32.totalorder %s26, %s27
      %p38 = scmp.eq.s32.totalorder %s18, 0
      %p39 = por %p37, %p38
      %p40 = scmp.ne.s32.totalorder %s26, %s27
      %p41 = scmp.eq.s32.totalorder %s19, 1
      %p42 = por %p40, %p41
      %p44 = scmp.ne.s32.totalorder %s27, %s43
      %p45 = scmp.eq.s32.totalorder %s19, 0
      %p46 = por %p44, %p45
      %s47 = ssub.s32 %s13, %s20
      %p48 = scmp.eq.s32.totalorder %s47, 0
      %s50 = sadd.s32 %s49, 1
      %s51 = scalar_select %p48, %s49, %s50
      %p54 = pneg %p48
      %p55 = scmp.eq.s32.totalorder %s13, 1
      %p56 = por %p54, %p55
      %p57 = scmp.ne.s32.totalorder %s49, %s52
      %p58 = scmp.eq.s32.totalorder %s13, 0
      %p59 = por %p57, %p58
      %p60 = scmp.ne.s32.totalorder %s49, %s52
      %p61 = scmp.eq.s32.totalorder %s18, 1
      %p62 = por %p60, %p61
      %p63 = scmp.ne.s32.totalorder %s52, %s53
      %p64 = scmp.eq.s32.totalorder %s18, 0
      %p65 = por %p63, %p64
      %p66 = scmp.ne.s32.totalorder %s52, %s53
      %p67 = scmp.eq.s32.totalorder %s19, 1
      %p68 = por %p66, %p67
      %p70 = scmp.ne.s32.totalorder %s53, %s69
      %p71 = scmp.eq.s32.totalorder %s19, 0
      %p72 = por %p70, %p71
      %p73 = scmp.le.s32.totalorder 1, %s13
      %p74 = scmp.lt.s32.totalorder %s13, 3
      %p75 = pnand %p73, %p74
      %p76 = pneg %p75
      // Predicated region
      $region9: #{tpu_custom_call.1} parent=5 // pred_check
        _
      $region10: #{tpu_custom_call.1} parent=5 // pred_check_branch
        %78 = sbr.rel (%p75) target = $region12
      $region11: #{tpu_custom_call.1} parent=5 // pred_region
        %s79 = ssub.s32 %s13, 1
      $region12: #{tpu_custom_call.1} parent=5 // pred_fallthru
        _
      %p80 = scmp.lt.s32.totalorder %s13, 2
      // Predicated region
      $region13: #{tpu_custom_call.1} parent=5 // pred_check
        %p81 = pneg %p80
      $region14: #{tpu_custom_call.1} parent=5 // pred_check_branch
        %83 = sbr.rel (%p81) target = $region16
      $region15: #{tpu_custom_call.1} parent=5 // pred_region
        // Predicated region
        $region17: #{tpu_custom_call.1} parent=15 // pred_check
          %p84 = pneg %p33
        $region18: #{tpu_custom_call.1} parent=15 // pred_check_branch
          %86 = sbr.rel (%p84) target = $region20
        $region19: #{tpu_custom_call.1} parent=15 // pred_region
          %s87 = sand.u32 %s23, 1
          %s88 = scalar_lea.sflag [#allocation3], %s87
          %s89 = sand.u32 %s23, 1
          %s90 = smul.addr %s89, 64
          %s91 = scalar_lea.vmem [#allocation2], %s90
          %s93 = ssub.s32 1024, 1024
          %94 = vsyncadd %s88, %s93
          %s95 = smul.addr %s13, 8
          %s96 = smul.addr %s95, 128
          %s97 = scalar_lea.hbm %s0, %s96
          %s98 = sshll.u32 %s91, 4
          %s99 = int_to_ptr.vmem [resolvable:$true] %s98
          %104 = dma.hbm_to_vmem [thread:$0]  %s97, 1024, %s99, %s88, 128, 128, 8
        $region20: #{tpu_custom_call.1} parent=15 // pred_fallthru
          _
      $region16: #{tpu_custom_call.1} parent=5 // pred_fallthru
        _
      %p105 = scmp.le.s32.totalorder 1, %s13
      %p106 = scmp.lt.s32.totalorder %s13, 3
      %p107 = pnand %p105, %p106
      %p108 = pneg %p107
      // Predicated region
      $region21: #{tpu_custom_call.1} parent=5 // pred_check
        _
      $region22: #{tpu_custom_call.1} parent=5 // pred_check_branch
        %110 = sbr.rel (%p107) target = $region24
      $region23: #{tpu_custom_call.1} parent=5 // pred_region
        %s111 = ssub.s32 %s13, 1
        %s112 = sand.u32 %s26, 1
        %s113 = scalar_lea.sflag [#allocation3], %s112
        %s114 = sand.u32 %s26, 1
        %s115 = smul.addr %s114, 64
        %s116 = scalar_lea.vmem [#allocation2], %s115
        // Predicated region
        $region25: #{tpu_custom_call.1} parent=23 // pred_check
          %p117 = pneg %p39
        $region26: #{tpu_custom_call.1} parent=23 // pred_check_branch
          %119 = sbr.rel (%p117) target = $region28
        $region27: #{tpu_custom_call.1} parent=23 // pred_region
          %120 = dma.done %s113, 1024
        $region28: #{tpu_custom_call.1} parent=23 // pred_fallthru
          _
        %s121 = sand.u32 %s26, 1
        %s122 = scalar_lea.sflag [#allocation3], %s121
        %s123 = sand.u32 %s26, 1
        %s124 = smul.addr %s123, 64
        %s125 = scalar_lea.vmem [#allocation2], %s124
        %p126 = pneg %p39
        %p127 = pneg %p36
        %p128 = pneg %p65
        %p129 = pneg %p62
        %s130 = sand.u32 %s52, 1
        %s131 = scalar_lea.sflag [#allocation4], %s130
        %s132 = sand.u32 %s52, 1
        %s133 = smul.addr %s132, 16
        %s134 = scalar_lea.vmem [#allocation5], %s133
        %v135 = vld [vmem:[%s116] sm:$0xff]
        %v136 = vld [vmem:[%s116 + $0x8] sm:$0xff]
        %s137 = scalar_lea.vmem %s116, 16 [#allocation2]
        %v138 = vld [vmem:[%s137] sm:$0xff]
        %v139 = vld [vmem:[%s137 + $0x8] sm:$0xff]
        %s140 = scalar_lea.vmem %s116, 32 [#allocation2]
        %v141 = vld [vmem:[%s140] sm:$0xff]
        %v142 = vld [vmem:[%s140 + $0x8] sm:$0xff]
        %s143 = scalar_lea.vmem %s116, 48 [#allocation2]
        %v144 = vld [vmem:[%s143] sm:$0xff]
        %v145 = vld [vmem:[%s143 + $0x8] sm:$0xff]
        %v147 = vrot.slane %v135, 1
        %148 = vrot.lane.b32.xlu0 %v147, 4
        %v149 = vpop.permute.xlu0 %148
        %v151 = vrot.slane %v135, 2
        %152 = vrot.lane.b32.xlu0 %v151, 8
        %v153 = vpop.permute.xlu0 %152
        %v155 = vrot.slane %v135, 3
        %156 = vrot.lane.b32.xlu0 %v155, 12
        %v157 = vpop.permute.xlu0 %156
        %160 = vrot.lane.b32.xlu0 %v138, 16
        %v161 = vpop.permute.xlu0 %160
        %v163 = vrot.slane %v138, 1
        %164 = vrot.lane.b32.xlu0 %v163, 20
        %v165 = vpop.permute.xlu0 %164
        %v167 = vrot.slane %v138, 2
        %168 = vrot.lane.b32.xlu0 %v167, 24
        %v169 = vpop.permute.xlu0 %168
        %v171 = vrot.slane %v138, 3
        %172 = vrot.lane.b32.xlu0 %v171, 28
        %v173 = vpop.permute.xlu0 %172
        %176 = vrot.lane.b32.xlu0 %v141, 32
        %v177 = vpop.permute.xlu0 %176
        %v179 = vrot.slane %v141, 1
        %180 = vrot.lane.b32.xlu0 %v179, 36
        %v181 = vpop.permute.xlu0 %180
        %v183 = vrot.slane %v141, 2
        %184 = vrot.lane.b32.xlu0 %v183, 40
        %v185 = vpop.permute.xlu0 %184
        %v187 = vrot.slane %v141, 3
        %188 = vrot.lane.b32.xlu0 %v187, 44
        %v189 = vpop.permute.xlu0 %188
        %192 = vrot.lane.b32.xlu0 %v144, 48
        %v193 = vpop.permute.xlu0 %192
        %v195 = vrot.slane %v144, 1
        %196 = vrot.lane.b32.xlu0 %v195, 52
        %v197 = vpop.permute.xlu0 %196
        %v199 = vrot.slane %v144, 2
        %200 = vrot.lane.b32.xlu0 %v199, 56
        %v201 = vpop.permute.xlu0 %200
        %v203 = vrot.slane %v144, 3
        %204 = vrot.lane.b32.xlu0 %v203, 60
        %v205 = vpop.permute.xlu0 %204
        %vm207 = vcmask 31744
        %v208 = vsel %vm207, %v135, %v149
        %vm209 = vcmask 64512
        %v210 = vsel %vm209, %v208, %v153
        %vm211 = vcmask 97280
        %v212 = vsel %vm211, %v210, %v157
        %vm213 = vcmask 130048
        %v214 = vsel %vm213, %v212, %v161
        %vm215 = vcmask 162816
        %v216 = vsel %vm215, %v214, %v165
        %vm217 = vcmask 195584
        %v218 = vsel %vm217, %v216, %v169
        %vm219 = vcmask 228352
        %v220 = vsel %vm219, %v218, %v173
        %vm221 = vcmask 261120
        %v222 = vsel %vm221, %v220, %v177
        %vm223 = vcmask 293888
        %v224 = vsel %vm223, %v222, %v181
        %vm225 = vcmask 326656
        %v226 = vsel %vm225, %v224, %v185
        %vm227 = vcmask 359424
        %v228 = vsel %vm227, %v226, %v189
        %vm229 = vcmask 392192
        %v230 = vsel %vm229, %v228, %v193
        %vm231 = vcmask 424960
        %v232 = vsel %vm231, %v230, %v197
        %vm233 = vcmask 457728
        %v234 = vsel %vm233, %v232, %v201
        %vm235 = vcmask 490496
        %v236 = vsel %vm235, %v234, %v205
        %237 = vrot.lane.b32.xlu0 %v135, 124
        %v238 = vpop.permute.xlu0 %237
        %241 = vrot.lane.b32.xlu0 %v151, 4
        %v242 = vpop.permute.xlu0 %241
        %244 = vrot.lane.b32.xlu0 %v155, 8
        %v245 = vpop.permute.xlu0 %244
        %247 = vrot.lane.b32.xlu0 %v138, 12
        %v248 = vpop.permute.xlu0 %247
        %250 = vrot.lane.b32.xlu0 %v163, 16
        %v251 = vpop.permute.xlu0 %250
        %253 = vrot.lane.b32.xlu0 %v167, 20
        %v254 = vpop.permute.xlu0 %253
        %256 = vrot.lane.b32.xlu0 %v171, 24
        %v257 = vpop.permute.xlu0 %256
        %259 = vrot.lane.b32.xlu0 %v141, 28
        %v260 = vpop.permute.xlu0 %259
        %262 = vrot.lane.b32.xlu0 %v179, 32
        %v263 = vpop.permute.xlu0 %262
        %265 = vrot.lane.b32.xlu0 %v183, 36
        %v266 = vpop.permute.xlu0 %265
        %268 = vrot.lane.b32.xlu0 %v187, 40
        %v269 = vpop.permute.xlu0 %268
        %271 = vrot.lane.b32.xlu0 %v144, 44
        %v272 = vpop.permute.xlu0 %271
        %274 = vrot.lane.b32.xlu0 %v195, 48
        %v275 = vpop.permute.xlu0 %274
        %277 = vrot.lane.b32.xlu0 %v199, 52
        %v278 = vpop.permute.xlu0 %277
        %280 = vrot.lane.b32.xlu0 %v203, 56
        %v281 = vpop.permute.xlu0 %280
        %v283 = vsel %vm207, %v238, %v147
        %v284 = vsel %vm209, %v283, %v242
        %v285 = vsel %vm211, %v284, %v245
        %v286 = vsel %vm213, %v285, %v248
        %v287 = vsel %vm215, %v286, %v251
        %v288 = vsel %vm217, %v287, %v254
        %v289 = vsel %vm219, %v288, %v257
        %v290 = vsel %vm221, %v289, %v260
        %v291 = vsel %vm223, %v290, %v263
        %v292 = vsel %vm225, %v291, %v266
        %v293 = vsel %vm227, %v292, %v269
        %v294 = vsel %vm229, %v293, %v272
        %v295 = vsel %vm231, %v294, %v275
        %v296 = vsel %vm233, %v295, %v278
        %v297 = vsel %vm235, %v296, %v281
        %298 = vrot.lane.b32.xlu0 %v135, 120
        %v299 = vpop.permute.xlu0 %298
        %301 = vrot.lane.b32.xlu0 %v147, 124
        %v302 = vpop.permute.xlu0 %301
        %305 = vrot.lane.b32.xlu0 %v155, 4
        %v306 = vpop.permute.xlu0 %305
        %308 = vrot.lane.b32.xlu0 %v138, 8
        %v309 = vpop.permute.xlu0 %308
        %311 = vrot.lane.b32.xlu0 %v163, 12
        %v312 = vpop.permute.xlu0 %311
        %314 = vrot.lane.b32.xlu0 %v167, 16
        %v315 = vpop.permute.xlu0 %314
        %317 = vrot.lane.b32.xlu0 %v171, 20
        %v318 = vpop.permute.xlu0 %317
        %320 = vrot.lane.b32.xlu0 %v141, 24
        %v321 = vpop.permute.xlu0 %320
        %323 = vrot.lane.b32.xlu0 %v179, 28
        %v324 = vpop.permute.xlu0 %323
        %326 = vrot.lane.b32.xlu0 %v183, 32
        %v327 = vpop.permute.xlu0 %326
        %329 = vrot.lane.b32.xlu0 %v187, 36
        %v330 = vpop.permute.xlu0 %329
        %332 = vrot.lane.b32.xlu0 %v144, 40
        %v333 = vpop.permute.xlu0 %332
        %335 = vrot.lane.b32.xlu0 %v195, 44
        %v336 = vpop.permute.xlu0 %335
        %338 = vrot.lane.b32.xlu0 %v199, 48
        %v339 = vpop.permute.xlu0 %338
        %341 = vrot.lane.b32.xlu0 %v203, 52
        %v342 = vpop.permute.xlu0 %341
        %v344 = vsel %vm207, %v299, %v302
        %v345 = vsel %vm209, %v344, %v151
        %v346 = vsel %vm211, %v345, %v306
        %v347 = vsel %vm213, %v346, %v309
        %v348 = vsel %vm215, %v347, %v312
        %v349 = vsel %vm217, %v348, %v315
        %v350 = vsel %vm219, %v349, %v318
        %v351 = vsel %vm221, %v350, %v321
        %v352 = vsel %vm223, %v351, %v324
        %v353 = vsel %vm225, %v352, %v327
        %v354 = vsel %vm227, %v353, %v330
        %v355 = vsel %vm229, %v354, %v333
        %v356 = vsel %vm231, %v355, %v336
        %v357 = vsel %vm233, %v356, %v339
        %v358 = vsel %vm235, %v357, %v342
        %359 = vrot.lane.b32.xlu0 %v135, 116
        %v360 = vpop.permute.xlu0 %359
        %362 = vrot.lane.b32.xlu0 %v147, 120
        %v363 = vpop.permute.xlu0 %362
        %365 = vrot.lane.b32.xlu0 %v151, 124
        %v366 = vpop.permute.xlu0 %365
        %369 = vrot.lane.b32.xlu0 %v138, 4
        %v370 = vpop.permute.xlu0 %369
        %372 = vrot.lane.b32.xlu0 %v163, 8
        %v373 = vpop.permute.xlu0 %372
        %375 = vrot.lane.b32.xlu0 %v167, 12
        %v376 = vpop.permute.xlu0 %375
        %378 = vrot.lane.b32.xlu0 %v171, 16
        %v379 = vpop.permute.xlu0 %378
        %381 = vrot.lane.b32.xlu0 %v141, 20
        %v382 = vpop.permute.xlu0 %381
        %384 = vrot.lane.b32.xlu0 %v179, 24
        %v385 = vpop.permute.xlu0 %384
        %387 = vrot.lane.b32.xlu0 %v183, 28
        %v388 = vpop.permute.xlu0 %387
        %390 = vrot.lane.b32.xlu0 %v187, 32
        %v391 = vpop.permute.xlu0 %390
        %393 = vrot.lane.b32.xlu0 %v144, 36
        %v394 = vpop.permute.xlu0 %393
        %396 = vrot.lane.b32.xlu0 %v195, 40
        %v397 = vpop.permute.xlu0 %396
        %399 = vrot.lane.b32.xlu0 %v199, 44
        %v400 = vpop.permute.xlu0 %399
        %402 = vrot.lane.b32.xlu0 %v203, 48
        %v403 = vpop.permute.xlu0 %402
        %v405 = vsel %vm207, %v360, %v363
        %v406 = vsel %vm209, %v405, %v366
        %v407 = vsel %vm211, %v406, %v155
        %v408 = vsel %vm213, %v407, %v370
        %v409 = vsel %vm215, %v408, %v373
        %v410 = vsel %vm217, %v409, %v376
        %v411 = vsel %vm219, %v410, %v379
        %v412 = vsel %vm221, %v411, %v382
        %v413 = vsel %vm223, %v412, %v385
        %v414 = vsel %vm225, %v413, %v388
        %v415 = vsel %vm227, %v414, %v391
        %v416 = vsel %vm229, %v415, %v394
        %v417 = vsel %vm231, %v416, %v397
        %v418 = vsel %vm233, %v417, %v400
        %v419 = vsel %vm235, %v418, %v403
        %v421 = vrot.slane %v136, 1
        %422 = vrot.lane.b32.xlu0 %v421, 4
        %v423 = vpop.permute.xlu0 %422
        %v425 = vrot.slane %v136, 2
        %426 = vrot.lane.b32.xlu0 %v425, 8
        %v427 = vpop.permute.xlu0 %426
        %v429 = vrot.slane %v136, 3
        %430 = vrot.lane.b32.xlu0 %v429, 12
        %v431 = vpop.permute.xlu0 %430
        %434 = vrot.lane.b32.xlu0 %v139, 16
        %v435 = vpop.permute.xlu0 %434
        %v437 = vrot.slane %v139, 1
        %438 = vrot.lane.b32.xlu0 %v437, 20
        %v439 = vpop.permute.xlu0 %438
        %v441 = vrot.slane %v139, 2
        %442 = vrot.lane.b32.xlu0 %v441, 24
        %v443 = vpop.permute.xlu0 %442
        %v445 = vrot.slane %v139, 3
        %446 = vrot.lane.b32.xlu0 %v445, 28
        %v447 = vpop.permute.xlu0 %446
        %450 = vrot.lane.b32.xlu0 %v142, 32
        %v451 = vpop.permute.xlu0 %450
        %v453 = vrot.slane %v142, 1
        %454 = vrot.lane.b32.xlu0 %v453, 36
        %v455 = vpop.permute.xlu0 %454
        %v457 = vrot.slane %v142, 2
        %458 = vrot.lane.b32.xlu0 %v457, 40
        %v459 = vpop.permute.xlu0 %458
        %v461 = vrot.slane %v142, 3
        %462 = vrot.lane.b32.xlu0 %v461, 44
        %v463 = vpop.permute.xlu0 %462
        %466 = vrot.lane.b32.xlu0 %v145, 48
        %v467 = vpop.permute.xlu0 %466
        %v469 = vrot.slane %v145, 1
        %470 = vrot.lane.b32.xlu0 %v469, 52
        %v471 = vpop.permute.xlu0 %470
        %v473 = vrot.slane %v145, 2
        %474 = vrot.lane.b32.xlu0 %v473, 56
        %v475 = vpop.permute.xlu0 %474
        %v477 = vrot.slane %v145, 3
        %478 = vrot.lane.b32.xlu0 %v477, 60
        %v479 = vpop.permute.xlu0 %478
        %v481 = vsel %vm207, %v136, %v423
        %v482 = vsel %vm209, %v481, %v427
        %v483 = vsel %vm211, %v482, %v431
        %v484 = vsel %vm213, %v483, %v435
        %v485 = vsel %vm215, %v484, %v439
        %v486 = vsel %vm217, %v485, %v443
        %v487 = vsel %vm219, %v486, %v447
        %v488 = vsel %vm221, %v487, %v451
        %v489 = vsel %vm223, %v488, %v455
        %v490 = vsel %vm225, %v489, %v459
        %v491 = vsel %vm227, %v490, %v463
        %v492 = vsel %vm229, %v491, %v467
        %v493 = vsel %vm231, %v492, %v471
        %v494 = vsel %vm233, %v493, %v475
        %v495 = vsel %vm235, %v494, %v479
        %496 = vrot.lane.b32.xlu0 %v136, 124
        %v497 = vpop.permute.xlu0 %496
        %500 = vrot.lane.b32.xlu0 %v425, 4
        %v501 = vpop.permute.xlu0 %500
        %503 = vrot.lane.b32.xlu0 %v429, 8
        %v504 = vpop.permute.xlu0 %503
        %506 = vrot.lane.b32.xlu0 %v139, 12
        %v507 = vpop.permute.xlu0 %506
        %509 = vrot.lane.b32.xlu0 %v437, 16
        %v510 = vpop.permute.xlu0 %509
        %512 = vrot.lane.b32.xlu0 %v441, 20
        %v513 = vpop.permute.xlu0 %512
        %515 = vrot.lane.b32.xlu0 %v445, 24
        %v516 = vpop.permute.xlu0 %515
        %518 = vrot.lane.b32.xlu0 %v142, 28
        %v519 = vpop.permute.xlu0 %518
        %521 = vrot.lane.b32.xlu0 %v453, 32
        %v522 = vpop.permute.xlu0 %521
        %524 = vrot.lane.b32.xlu0 %v457, 36
        %v525 = vpop.permute.xlu0 %524
        %527 = vrot.lane.b32.xlu0 %v461, 40
        %v528 = vpop.permute.xlu0 %527
        %530 = vrot.lane.b32.xlu0 %v145, 44
        %v531 = vpop.permute.xlu0 %530
        %533 = vrot.lane.b32.xlu0 %v469, 48
        %v534 = vpop.permute.xlu0 %533
        %536 = vrot.lane.b32.xlu0 %v473, 52
        %v537 = vpop.permute.xlu0 %536
        %539 = vrot.lane.b32.xlu0 %v477, 56
        %v540 = vpop.permute.xlu0 %539
        %v542 = vsel %vm207, %v497, %v421
        %v543 = vsel %vm209, %v542, %v501
        %v544 = vsel %vm211, %v543, %v504
        %v545 = vsel %vm213, %v544, %v507
        %v546 = vsel %vm215, %v545, %v510
        %v547 = vsel %vm217, %v546, %v513
        %v548 = vsel %vm219, %v547, %v516
        %v549 = vsel %vm221, %v548, %v519
        %v550 = vsel %vm223, %v549, %v522
        %v551 = vsel %vm225, %v550, %v525
        %v552 = vsel %vm227, %v551, %v528
        %v553 = vsel %vm229, %v552, %v531
        %v554 = vsel %vm231, %v553, %v534
        %v555 = vsel %vm233, %v554, %v537
        %v556 = vsel %vm235, %v555, %v540
        %557 = vrot.lane.b32.xlu0 %v136, 120
        %v558 = vpop.permute.xlu0 %557
        %560 = vrot.lane.b32.xlu0 %v421, 124
        %v561 = vpop.permute.xlu0 %560
        %564 = vrot.lane.b32.xlu0 %v429, 4
        %v565 = vpop.permute.xlu0 %564
        %567 = vrot.lane.b32.xlu0 %v139, 8
        %v568 = vpop.permute.xlu0 %567
        %570 = vrot.lane.b32.xlu0 %v437, 12
        %v571 = vpop.permute.xlu0 %570
        %573 = vrot.lane.b32.xlu0 %v441, 16
        %v574 = vpop.permute.xlu0 %573
        %576 = vrot.lane.b32.xlu0 %v445, 20
        %v577 = vpop.permute.xlu0 %576
        %579 = vrot.lane.b32.xlu0 %v142, 24
        %v580 = vpop.permute.xlu0 %579
        %582 = vrot.lane.b32.xlu0 %v453, 28
        %v583 = vpop.permute.xlu0 %582
        %585 = vrot.lane.b32.xlu0 %v457, 32
        %v586 = vpop.permute.xlu0 %585
        %588 = vrot.lane.b32.xlu0 %v461, 36
        %v589 = vpop.permute.xlu0 %588
        %591 = vrot.lane.b32.xlu0 %v145, 40
        %v592 = vpop.permute.xlu0 %591
        %594 = vrot.lane.b32.xlu0 %v469, 44
        %v595 = vpop.permute.xlu0 %594
        %597 = vrot.lane.b32.xlu0 %v473, 48
        %v598 = vpop.permute.xlu0 %597
        %600 = vrot.lane.b32.xlu0 %v477, 52
        %v601 = vpop.permute.xlu0 %600
        %v603 = vsel %vm207, %v558, %v561
        %v604 = vsel %vm209, %v603, %v425
        %v605 = vsel %vm211, %v604, %v565
        %v606 = vsel %vm213, %v605, %v568
        %v607 = vsel %vm215, %v606, %v571
        %v608 = vsel %vm217, %v607, %v574
        %v609 = vsel %vm219, %v608, %v577
        %v610 = vsel %vm221, %v609, %v580
        %v611 = vsel %vm223, %v610, %v583
        %v612 = vsel %vm225, %v611, %v586
        %v613 = vsel %vm227, %v612, %v589
        %v614 = vsel %vm229, %v613, %v592
        %v615 = vsel %vm231, %v614, %v595
        %v616 = vsel %vm233, %v615, %v598
        %v617 = vsel %vm235, %v616, %v601
        %618 = vrot.lane.b32.xlu0 %v136, 116
        %v619 = vpop.permute.xlu0 %618
        %621 = vrot.lane.b32.xlu0 %v421, 120
        %v622 = vpop.permute.xlu0 %621
        %624 = vrot.lane.b32.xlu0 %v425, 124
        %v625 = vpop.permute.xlu0 %624
        %628 = vrot.lane.b32.xlu0 %v139, 4
        %v629 = vpop.permute.xlu0 %628
        %631 = vrot.lane.b32.xlu0 %v437, 8
        %v632 = vpop.permute.xlu0 %631
        %634 = vrot.lane.b32.xlu0 %v441, 12
        %v635 = vpop.permute.xlu0 %634
        %637 = vrot.lane.b32.xlu0 %v445, 16
        %v638 = vpop.permute.xlu0 %637
        %640 = vrot.lane.b32.xlu0 %v142, 20
        %v641 = vpop.permute.xlu0 %640
        %643 = vrot.lane.b32.xlu0 %v453, 24
        %v644 = vpop.permute.xlu0 %643
        %646 = vrot.lane.b32.xlu0 %v457, 28
        %v647 = vpop.permute.xlu0 %646
        %649 = vrot.lane.b32.xlu0 %v461, 32
        %v650 = vpop.permute.xlu0 %649
        %652 = vrot.lane.b32.xlu0 %v145, 36
        %v653 = vpop.permute.xlu0 %652
        %655 = vrot.lane.b32.xlu0 %v469, 40
        %v656 = vpop.permute.xlu0 %655
        %658 = vrot.lane.b32.xlu0 %v473, 44
        %v659 = vpop.permute.xlu0 %658
        %661 = vrot.lane.b32.xlu0 %v477, 48
        %v662 = vpop.permute.xlu0 %661
        %v664 = vsel %vm207, %v619, %v622
        %v665 = vsel %vm209, %v664, %v625
        %v666 = vsel %vm211, %v665, %v429
        %v667 = vsel %vm213, %v666, %v629
        %v668 = vsel %vm215, %v667, %v632
        %v669 = vsel %vm217, %v668, %v635
        %v670 = vsel %vm219, %v669, %v638
        %v671 = vsel %vm221, %v670, %v641
        %v672 = vsel %vm223, %v671, %v644
        %v673 = vsel %vm225, %v672, %v647
        %v674 = vsel %vm227, %v673, %v650
        %v675 = vsel %vm229, %v674, %v653
        %v676 = vsel %vm231, %v675, %v656
        %v677 = vsel %vm233, %v676, %v659
        %v678 = vsel %vm235, %v677, %v662
        %v680 = vrot.slane %v297, 7
        %v683 = vrot.slane %v358, 6
        %v686 = vrot.slane %v419, 5
        %v689 = vrot.slane %v556, 7
        %v692 = vrot.slane %v617, 6
        %v695 = vrot.slane %v678, 5
        %vm697 = vcmask 1040384
        %v698 = vsel %vm697, %v236, %v680
        %vm699 = vcmask 1041408
        %v700 = vsel %vm699, %v698, %v683
        %vm701 = vcmask 1042432
        %v702 = vsel %vm701, %v700, %v686
        %vm703 = vcmask 1043456
        %v704 = vsel %vm703, %v702, %v236
        %vm705 = vcmask 1044480
        %v706 = vsel %vm705, %v704, %v680
        %vm707 = vcmask 1045504
        %v708 = vsel %vm707, %v706, %v683
        %vm709 = vcmask 1046528
        %v710 = vsel %vm709, %v708, %v686
        %v711 = vsel %vm697, %v495, %v689
        %v712 = vsel %vm699, %v711, %v692
        %v713 = vsel %vm701, %v712, %v695
        %v714 = vsel %vm703, %v713, %v495
        %v715 = vsel %vm705, %v714, %v689
        %v716 = vsel %vm707, %v715, %v692
        %v717 = vsel %vm709, %v716, %v695
        %vm718 = vcmask 523264
        %719 = vst.msk [vmem:[%s134] sm:$0xff] %vm718, %v710
        %720 = vst.msk [vmem:[%s134 + $0x8] sm:$0xff] %vm718, %v717
        %s721 = sand.u32 %s52, 1
        %s722 = scalar_lea.sflag [#allocation4], %s721
        %s723 = sand.u32 %s52, 1
        %s724 = smul.addr %s723, 16
        %s725 = scalar_lea.vmem [#allocation5], %s724
        // Predicated region
        $region29: #{tpu_custom_call.1} parent=23 // pred_check
          %p726 = pneg %p62
        $region30: #{tpu_custom_call.1} parent=23 // pred_check_branch
          %728 = sbr.rel (%p726) target = $region32
        $region31: #{tpu_custom_call.1} parent=23 // pred_region
          %s730 = ssub.s32 256, 256
          %731 = vsyncadd %s722, %s730
          %s732 = smul.addr %s18, 2
          %s733 = smul.addr %s732, 128
          %s734 = scalar_lea.hbm %s1, %s733
          %s735 = sshll.u32 %s725, 4
          %s736 = int_to_ptr.vmem [resolvable:$true] %s735
          %741 = dma.vmem_to_hbm [thread:$0]  %s736, 256, %s734, %s722, 128, 128, 8
        $region32: #{tpu_custom_call.1} parent=23 // pred_fallthru
          _
      $region24: #{tpu_custom_call.1} parent=5 // pred_fallthru
        _
      %p742 = scmp.le.s32.totalorder 2, %s13
      // Predicated region
      $region33: #{tpu_custom_call.1} parent=5 // pred_check
        %p743 = pneg %p742
      $region34: #{tpu_custom_call.1} parent=5 // pred_check_branch
        %745 = sbr.rel (%p743) target = $region36
      $region35: #{tpu_custom_call.1} parent=5 // pred_region
        %s746 = ssub.s32 %s13, 2
        // Predicated region
        $region37: #{tpu_custom_call.1} parent=35 // pred_check
          %p747 = pneg %p68
        $region38: #{tpu_custom_call.1} parent=35 // pred_check_branch
          %749 = sbr.rel (%p747) target = $region40
        $region39: #{tpu_custom_call.1} parent=35 // pred_region
          %s750 = sand.u32 %s53, 1
          %s751 = scalar_lea.sflag [#allocation4], %s750
          %s752 = sand.u32 %s53, 1
          %s753 = smul.addr %s752, 16
          %s754 = scalar_lea.vmem [#allocation5], %s753
          %755 = dma.done %s751, 256
        $region40: #{tpu_custom_call.1} parent=35 // pred_fallthru
          _
      $region36: #{tpu_custom_call.1} parent=5 // pred_fallthru
        _
    $region6: #{tpu_custom_call.1} parent=1 // loop_footer
      %s17 = sadd.s32 1, %s13
    $region7: #{tpu_custom_call.1} parent=1 // loop_footer_branch
      %12 = sbr.rel target = $region3
    $region8: #{tpu_custom_call.1} parent=1 // loop_exit
      _
    %756 = vsyncpa [#allocation3], 1
    %s757 = scalar_lea.sflag [#allocation3], 1
    %758 = vsyncpa %s757, 1
    %759 = vsyncpa [#allocation4], 1
    %s760 = scalar_lea.sflag [#allocation4], 1
    %761 = vsyncpa %s760, 1

</llo_original>
